<compile_context>
chip_gen: v6e
topology: v6e:2x2x1
jax: 0.10.0
libtpu: 0.0.40
codegen_flags: <defaults>
</compile_context>

<pallas_src>
import functools

import jax
import jax.numpy as jnp
from jax.experimental import pallas as pl
from jax.experimental.pallas import tpu as pltpu

# Generation-safe scoped-VMEM budget (v7x has 64 MiB physical per TC).
VMEM_LIMIT = 32 * 1024 * 1024


# ----------------------------------------------------------------------------
# Fused Conv2d(3x3, stride=1, pad=1, bias) + BatchNorm2d (batch stats) + ReLU
# ----------------------------------------------------------------------------
def _conv_bn_relu_kernel(p_ref, w_ref, b_ref, g_ref, be_ref, o_ref, *, count, eps):
    # p_ref : (Kp, L)   bf16 im2col patches, L = N*H*W (lane-dense)
    # w_ref : (Cout, Kp) bf16 reshaped conv weights
    # b_ref, g_ref, be_ref : (Cout, 1) f32 conv-bias / BN-gamma / BN-beta
    # o_ref : (Cout, L) f32 normalized + ReLU'd activations
    y = jnp.dot(w_ref[...], p_ref[...], preferred_element_type=jnp.float32)
    y = y + b_ref[...]                                   # conv bias (broadcast over lanes)

    inv_n = 1.0 / count
    s = jnp.sum(y, axis=-1, keepdims=True)               # (Cout, 1) per-channel sum
    ss = jnp.sum(y * y, axis=-1, keepdims=True)          # (Cout, 1) per-channel sum of squares
    mean = s * inv_n
    var = ss * inv_n - mean * mean                       # biased variance (PyTorch training mode)
    scale = g_ref[...] * jax.lax.rsqrt(var + eps)
    shift = be_ref[...] - mean * scale

    o_ref[...] = jnp.maximum(y * scale + shift, 0.0)     # BN affine + ReLU, f32 elementwise


def _im2col(x):
    """x: (C, N, H, W) -> patches (9*C, N*H*W), ordered [c*9 + (dy*3+dx)]."""
    C, N, H, W = x.shape
    xp = jnp.pad(x, ((0, 0), (0, 0), (1, 1), (1, 1)))
    taps = [xp[:, :, dy:dy + H, dx:dx + W] for dy in range(3) for dx in range(3)]
    patches = jnp.stack(taps, axis=1)                    # (C, 9, N, H, W)
    return patches.reshape(C * 9, N * H * W)


def conv_bn_relu(x, w, b, gamma, beta, eps=1e-5):
    """x: (Cin, N, H, W) f32, w: (Cout, Cin, 3, 3) PyTorch layout -> (Cout, N, H, W)."""
    Cin, N, H, W = x.shape
    Cout = w.shape[0]
    L = N * H * W
    K = Cin * 9

    patches = _im2col(x)                                 # (K, L)
    w2 = w.reshape(Cout, K)                              # matches patch ordering

    # Pad K to a multiple of 16 so the bf16 RHS sublane dim is tile-aligned.
    Kp = ((K + 15) // 16) * 16
    if Kp != K:
        patches = jnp.pad(patches, ((0, Kp - K), (0, 0)))
        w2 = jnp.pad(w2, ((0, 0), (0, Kp - K)))

    patches = patches.astype(jnp.bfloat16)               # bf16 MXU operands, f32 accumulate
    w2 = w2.astype(jnp.bfloat16)

    kern = functools.partial(_conv_bn_relu_kernel, count=float(L), eps=eps)
    out = pl.pallas_call(
        kern,
        out_shape=jax.ShapeDtypeStruct((Cout, L), jnp.float32),
        grid=(1,),
        in_specs=[
            pl.BlockSpec((Kp, L), lambda i: (0, 0)),
            pl.BlockSpec((Cout, Kp), lambda i: (0, 0)),
            pl.BlockSpec((Cout, 1), lambda i: (0, 0)),
            pl.BlockSpec((Cout, 1), lambda i: (0, 0)),
            pl.BlockSpec((Cout, 1), lambda i: (0, 0)),
        ],
        out_specs=pl.BlockSpec((Cout, L), lambda i: (0, 0)),
        compiler_params=pltpu.CompilerParams(
            dimension_semantics=("arbitrary",), vmem_limit_bytes=VMEM_LIMIT),
    )(patches, w2, b.reshape(Cout, 1), gamma.reshape(Cout, 1), beta.reshape(Cout, 1))
    return out.reshape(Cout, N, H, W)


# ----------------------------------------------------------------------------
# MaxPool2d(p) -- plain-JAX glue on (C, N, H, W)
# TODO(synk): pooling (lane-splitting reshape+max) left in plain JAX; the
#             conv/BN/ReLU hot path is fully fused in the Pallas kernel above.
# ----------------------------------------------------------------------------
def maxpool(x, p):
    C, N, H, W = x.shape
    return jnp.max(x.reshape(C, N, H // p, p, W // p, p), axis=(3, 5))


# ----------------------------------------------------------------------------
# Linear (bias=True).  Per review this is padding-dominated but negligible
# (2x256 @ 256x10); kept as a single full-block Pallas matmul for completeness.
# ----------------------------------------------------------------------------
def _linear_kernel(x_ref, w_ref, b_ref, o_ref):
    o_ref[...] = jnp.dot(x_ref[...], w_ref[...],
                         preferred_element_type=jnp.float32) + b_ref[...]


def linear(x, w, b):
    """x: (N, F), w: (T, F) PyTorch layout, b: (T,) -> (N, T) = x @ w.T + b."""
    N, F = x.shape
    T = w.shape[0]
    wT = jnp.transpose(w)                                # (F, T)
    return pl.pallas_call(
        _linear_kernel,
        out_shape=jax.ShapeDtypeStruct((N, T), jnp.float32),
        grid=(1,),
        in_specs=[
            pl.BlockSpec((N, F), lambda i: (0, 0)),
            pl.BlockSpec((F, T), lambda i: (0, 0)),
            pl.BlockSpec((1, T), lambda i: (0, 0)),
        ],
        out_specs=pl.BlockSpec((N, T), lambda i: (0, 0)),
        compiler_params=pltpu.CompilerParams(vmem_limit_bytes=VMEM_LIMIT),
    )(x, wT, b.reshape(1, T))


# ----------------------------------------------------------------------------
# Parameter init (deterministic, shapes taken from the PyTorch __init__)
# ----------------------------------------------------------------------------
def init_params(key, in_channels, num_targets, k):
    chans = [(in_channels, k), (k, 2 * k), (2 * k, 4 * k), (4 * k, 8 * k)]
    keys = jax.random.split(key, 4 * 3 + 2)
    params = {}
    for i, (cin, cout) in enumerate(chans, start=1):
        kw, kb, kg = keys[3 * (i - 1)], keys[3 * (i - 1) + 1], keys[3 * (i - 1) + 2]
        # PyTorch conv-weight layout: (Cout, Cin, 3, 3)
        params[f"w{i}"] = jax.random.normal(kw, (cout, cin, 3, 3), jnp.float32) / jnp.sqrt(9.0 * cin)
        params[f"b{i}"] = 0.1 * jax.random.normal(kb, (cout,), jnp.float32)
        params[f"g{i}"] = 1.0 + 0.1 * jax.random.normal(kg, (cout,), jnp.float32)  # BN weight
        params[f"be{i}"] = jnp.zeros((cout,), jnp.float32)                          # BN bias
    flat = 8 * k * 4
    params["wl"] = jax.random.normal(keys[-2], (num_targets, flat), jnp.float32) / jnp.sqrt(flat)
    params["bl"] = 0.1 * jax.random.normal(keys[-1], (num_targets,), jnp.float32)
    return params


# ----------------------------------------------------------------------------
# Forward pass (matches nn.Sequential order of the PyTorch module)
# ----------------------------------------------------------------------------
def forward(params, x_nchw):
    # NCHW -> CNHW (channel-first through the whole net; no per-layer transposes)
    x = jnp.transpose(x_nchw, (1, 0, 2, 3)).astype(jnp.float32)

    x = conv_bn_relu(x, params["w1"], params["b1"], params["g1"], params["be1"])

    x = conv_bn_relu(x, params["w2"], params["b2"], params["g2"], params["be2"])
    x = maxpool(x, 2)

    x = conv_bn_relu(x, params["w3"], params["b3"], params["g3"], params["be3"])
    x = maxpool(x, 2)

    x = conv_bn_relu(x, params["w4"], params["b4"], params["g4"], params["be4"])
    x = maxpool(x, 2)

    x = maxpool(x, 4)                                    # (8k, N, 2, 2)

    # Flatten exactly like PyTorch: NCHW .view(N, -1)  => channel-major order
    N = x.shape[1]
    feat = jnp.transpose(x, (1, 0, 2, 3)).reshape(N, -1)  # (N, 8k*4)

    return linear(feat, params["wl"], params["bl"])       # (N, num_targets)


if __name__ == "__main__":
    # Linear expects k*8*4 features, which forces the input spatial size to
    # 64x64 (64 /2/2/2/4 = 2 -> 2x2 final grid).  Keep everything else small.
    B, IN_CH, K, NUM_TARGETS = 2, 3, 8, 10
    key = jax.random.PRNGKey(0)
    k_x, k_p = jax.random.split(key)

    x = jax.random.normal(k_x, (B, IN_CH, 64, 64), jnp.float32)    # NCHW like PyTorch
    params = init_params(k_p, IN_CH, NUM_TARGETS, K)

    out = forward(params, x)
    out = jax.block_until_ready(out)
    assert out.shape == (B, NUM_TARGETS), out.shape
    assert out.dtype == jnp.float32
    print("KERNEL_OK")
</pallas_src>

<mosaic_0001>
module attributes {stable_mosaic.version = 11 : i64} {
  func.func @_conv_bn_relu_kernel(%arg0: i32, %arg1: memref<32x8192xbf16, #tpu.memory_space<vmem>>, %arg2: memref<8x32xbf16, #tpu.memory_space<vmem>>, %arg3: memref<8x1xf32, #tpu.memory_space<vmem>>, %arg4: memref<8x1xf32, #tpu.memory_space<vmem>>, %arg5: memref<8x1xf32, #tpu.memory_space<vmem>>, %arg6: memref<8x8192xf32, #tpu.memory_space<vmem>>) attributes {dimension_semantics = [#tpu.dimension_semantics<arbitrary>], iteration_bounds = array<i64: 1>, scalar_prefetch = 0 : i64, scratch_operands = 0 : i64, tpu.core_type = #tpu.core_type<tc>, window_params = [{pipeline_mode = #tpu.pipeline_mode<synchronous>, transform_indices = @transform_0, window_bounds = array<i64: 32, 8192>}, {pipeline_mode = #tpu.pipeline_mode<synchronous>, transform_indices = @transform_1, window_bounds = array<i64: 8, 32>}, {pipeline_mode = #tpu.pipeline_mode<synchronous>, transform_indices = @transform_2, window_bounds = array<i64: 8, 1>}, {pipeline_mode = #tpu.pipeline_mode<synchronous>, transform_indices = @transform_3, window_bounds = array<i64: 8, 1>}, {pipeline_mode = #tpu.pipeline_mode<synchronous>, transform_indices = @transform_4, window_bounds = array<i64: 8, 1>}, {pipeline_mode = #tpu.pipeline_mode<synchronous>, transform_indices = @transform_5, window_bounds = array<i64: 8, 8192>}]} {
    %c0 = arith.constant 0 : index
    %c0_0 = arith.constant 0 : index
    %0 = vector.load %arg2[%c0, %c0_0] : memref<8x32xbf16, #tpu.memory_space<vmem>>, vector<8x32xbf16>
    %c0_1 = arith.constant 0 : index
    %c0_2 = arith.constant 0 : index
    %1 = vector.load %arg1[%c0_1, %c0_2] : memref<32x8192xbf16, #tpu.memory_space<vmem>>, vector<32x8192xbf16>
    %cst = arith.constant dense<0.000000e+00> : vector<8x8192xf32>
    %2 = tpu.matmul %0, %1, %cst {dimension_numbers = #tpu.dot_dimension_numbers<[1], [0], [0], [1], [0, 0, 1, 1], [], []>} : vector<8x32xbf16>, vector<32x8192xbf16>, vector<8x8192xf32> -> vector<8x8192xf32>
    %c0_3 = arith.constant 0 : index
    %c0_4 = arith.constant 0 : index
    %3 = vector.load %arg3[%c0_3, %c0_4] : memref<8x1xf32, #tpu.memory_space<vmem>>, vector<8x1xf32>
    %4 = vector.broadcast %3 : vector<8x1xf32> to vector<8x8192xf32>
    %5 = arith.addf %2, %4 : vector<8x8192xf32>
    %cst_5 = arith.constant dense<0.000000e+00> : vector<8xf32>
    %6 = vector.multi_reduction <add>, %5, %cst_5 [1] : vector<8x8192xf32> to vector<8xf32>
    %7 = vector.shape_cast %6 : vector<8xf32> to vector<8x1xf32>
    %8 = arith.mulf %5, %5 : vector<8x8192xf32>
    %cst_6 = arith.constant dense<0.000000e+00> : vector<8xf32>
    %9 = vector.multi_reduction <add>, %8, %cst_6 [1] : vector<8x8192xf32> to vector<8xf32>
    %10 = vector.shape_cast %9 : vector<8xf32> to vector<8x1xf32>
    %cst_7 = arith.constant 1.22070313E-4 : f32
    %11 = vector.broadcast %cst_7 : f32 to vector<8x1xf32>
    %12 = arith.mulf %7, %11 : vector<8x1xf32>
    %cst_8 = arith.constant 1.22070313E-4 : f32
    %13 = vector.broadcast %cst_8 : f32 to vector<8x1xf32>
    %14 = arith.mulf %10, %13 : vector<8x1xf32>
    %15 = arith.mulf %12, %12 : vector<8x1xf32>
    %16 = arith.subf %14, %15 : vector<8x1xf32>
    %c0_9 = arith.constant 0 : index
    %c0_10 = arith.constant 0 : index
    %17 = vector.load %arg4[%c0_9, %c0_10] : memref<8x1xf32, #tpu.memory_space<vmem>>, vector<8x1xf32>
    %cst_11 = arith.constant 9.99999974E-6 : f32
    %18 = vector.broadcast %cst_11 : f32 to vector<8x1xf32>
    %19 = arith.addf %16, %18 : vector<8x1xf32>
    %20 = math.rsqrt %19 : vector<8x1xf32>
    %21 = arith.mulf %17, %20 : vector<8x1xf32>
    %c0_12 = arith.constant 0 : index
    %c0_13 = arith.constant 0 : index
    %22 = vector.load %arg5[%c0_12, %c0_13] : memref<8x1xf32, #tpu.memory_space<vmem>>, vector<8x1xf32>
    %23 = arith.mulf %12, %21 : vector<8x1xf32>
    %24 = arith.subf %22, %23 : vector<8x1xf32>
    %25 = vector.broadcast %21 : vector<8x1xf32> to vector<8x8192xf32>
    %26 = arith.mulf %5, %25 : vector<8x8192xf32>
    %27 = vector.broadcast %24 : vector<8x1xf32> to vector<8x8192xf32>
    %28 = arith.addf %26, %27 : vector<8x8192xf32>
    %cst_14 = arith.constant 0.000000e+00 : f32
    %29 = vector.broadcast %cst_14 : f32 to vector<8x8192xf32>
    %30 = arith.maximumf %28, %29 : vector<8x8192xf32>
    %c0_15 = arith.constant 0 : index
    %c0_16 = arith.constant 0 : index
    %31 = vector.load %arg6[%c0_15, %c0_16] : memref<8x8192xf32, #tpu.memory_space<vmem>>, vector<8x8192xf32>
    tpu.vector_store %arg6[%c0_15, %c0_16], %30 {strides = array<i32>} : memref<8x8192xf32, #tpu.memory_space<vmem>>, vector<8x8192xf32>,
    return
  }
  func.func @transform_0(%arg0: i32) -> (i32, i32) {
    %c0_i32 = arith.constant 0 : i32
    %c0_i32_0 = arith.constant 0 : i32
    %c0_i32_1 = arith.constant 0 : i32
    return %c0_i32, %c0_i32_0 : i32, i32
  }
  func.func @transform_1(%arg0: i32) -> (i32, i32) {
    %c0_i32 = arith.constant 0 : i32
    %c0_i32_0 = arith.constant 0 : i32
    %c0_i32_1 = arith.constant 0 : i32
    return %c0_i32, %c0_i32_0 : i32, i32
  }
  func.func @transform_2(%arg0: i32) -> (i32, i32) {
    %c0_i32 = arith.constant 0 : i32
    %c0_i32_0 = arith.constant 0 : i32
    %c0_i32_1 = arith.constant 0 : i32
    return %c0_i32, %c0_i32_0 : i32, i32
  }
  func.func @transform_3(%arg0: i32) -> (i32, i32) {
    %c0_i32 = arith.constant 0 : i32
    %c0_i32_0 = arith.constant 0 : i32
    %c0_i32_1 = arith.constant 0 : i32
    return %c0_i32, %c0_i32_0 : i32, i32
  }
  func.func @transform_4(%arg0: i32) -> (i32, i32) {
    %c0_i32 = arith.constant 0 : i32
    %c0_i32_0 = arith.constant 0 : i32
    %c0_i32_1 = arith.constant 0 : i32
    return %c0_i32, %c0_i32_0 : i32, i32
  }
  func.func @transform_5(%arg0: i32) -> (i32, i32) {
    %c0_i32 = arith.constant 0 : i32
    %c0_i32_0 = arith.constant 0 : i32
    %c0_i32_1 = arith.constant 0 : i32
    return %c0_i32, %c0_i32_0 : i32, i32
  }
}

</mosaic_0001>

<llo_original>
// kernel: tpu_custom_call.1
$region0: #{tpu_custom_call.1}
  #allocation0 [shape = 'u32[]', space=smem, size = 0x4, offset = 0x4, fixed_abs, tag = 'smem constant byte address 0x4 - core index']
  #allocation1 [shape = 'u32[144,128]{1,0:T(1,128)}', space=vmem, size = 0x12000, scoped, tag = 'internal scratch']
  %s0 = inlined_call_operand.hbm [shape: bf16[32,8192], index: 0, kind: input, shape index: {}]
  %s1 = inlined_call_operand.vmem [shape: bf16[8,32], index: 1, kind: input, shape index: {}]
  %s2 = inlined_call_operand.vmem [shape: f32[8,1], index: 2, kind: input, shape index: {}]
  %s3 = inlined_call_operand.vmem [shape: f32[8,1], index: 3, kind: input, shape index: {}]
  %s4 = inlined_call_operand.vmem [shape: f32[8,1], index: 4, kind: input, shape index: {}]
  %s5 = inlined_call_operand.hbm [shape: f32[8,8192], index: 5, kind: output, shape index: {}]
  %s6 = sld [smem:[#allocation0]]
  $region34: #{tpu_custom_call.1} parent=0
    _
  %s8 = ssub.s32 1, %s6
  %s9 = scalar_select 0, %s8, %s6
  $region1: #{tpu_custom_call.1} parent=0
    #allocation2 [shape = 'u8[524288]{0}', space=vmem, size = 0x80000, scoped, tag = 'input window, operand 0, single buffered']
    #allocation3 [shape = 's32[1]{0}', space=sflag, size = 0x4, scoped, tag = 'scoped memory for tpu_custom_call.1']
    #allocation4 [shape = 's32[1]{0}', space=sflag, size = 0x4, scoped, tag = 'scoped memory for tpu_custom_call.1']
    #allocation5 [shape = 'u8[262144]{0}', space=vmem, size = 0x40000, scoped, tag = 'output window, operand 0, single buffered']
    %10 = vsyncpa [#allocation3], 0
    %11 = vsyncpa [#allocation4], 0
    // Predicated region
    $region2: #{tpu_custom_call.1} parent=1 // pred_check
      _
    $region3: #{tpu_custom_call.1} parent=1 // pred_check_branch
      %13 = sbr.rel (0) target = $region5
    $region4: #{tpu_custom_call.1} parent=1 // pred_region
      %s15 = ssub.s32 16384, 16384
      %16 = vsyncadd [#allocation3], %s15
      %s17 = sshll.u32 [#allocation2], 4
      %s18 = int_to_ptr.vmem [resolvable:$true] %s17
      %23 = dma.hbm_to_vmem [thread:$0]  %s0, 16384, %s18, [#allocation3], 4096, 4096, 256
    $region5: #{tpu_custom_call.1} parent=1 // pred_fallthru
      _
    // Predicated region
    $region6: #{tpu_custom_call.1} parent=1 // pred_check
      _
    $region7: #{tpu_custom_call.1} parent=1 // pred_check_branch
      %25 = sbr.rel (0) target = $region9
    $region8: #{tpu_custom_call.1} parent=1 // pred_region
      _
    $region9: #{tpu_custom_call.1} parent=1 // pred_fallthru
      _
    // Predicated region
    $region10: #{tpu_custom_call.1} parent=1 // pred_check
      _
    $region11: #{tpu_custom_call.1} parent=1 // pred_check_branch
      %27 = sbr.rel (0) target = $region13
    $region12: #{tpu_custom_call.1} parent=1 // pred_region
      _
    $region13: #{tpu_custom_call.1} parent=1 // pred_fallthru
      _
    // Predicated region
    $region14: #{tpu_custom_call.1} parent=1 // pred_check
      _
    $region15: #{tpu_custom_call.1} parent=1 // pred_check_branch
      %29 = sbr.rel (0) target = $region17
    $region16: #{tpu_custom_call.1} parent=1 // pred_region
      _
    $region17: #{tpu_custom_call.1} parent=1 // pred_fallthru
      _
    // Predicated region
    $region18: #{tpu_custom_call.1} parent=1 // pred_check
      _
    $region19: #{tpu_custom_call.1} parent=1 // pred_check_branch
      %31 = sbr.rel (0) target = $region21
    $region20: #{tpu_custom_call.1} parent=1 // pred_region
      _
    $region21: #{tpu_custom_call.1} parent=1 // pred_fallthru
      _
    // Predicated region
    $region22: #{tpu_custom_call.1} parent=1 // pred_check
      _
    $region23: #{tpu_custom_call.1} parent=1 // pred_check_branch
      %33 = sbr.rel (0) target = $region25
    $region24: #{tpu_custom_call.1} parent=1 // pred_region
      %34 = dma.done [#allocation3], 16384
    $region25: #{tpu_custom_call.1} parent=1 // pred_fallthru
      _
    %v36 = vld [vmem:[%s1] sm:$0xf]
    %v37 = vld [vmem:[#allocation2] sm:$0xff]
    %v38 = vld [vmem:[#allocation2 + $0x8] sm:$0xff]
    %v39 = vld [vmem:[#allocation2 + $0x10] sm:$0xff]
    %v40 = vld [vmem:[#allocation2 + $0x18] sm:$0xff]
    %v41 = vld [vmem:[#allocation2 + $0x20] sm:$0xff]
    %v42 = vld [vmem:[#allocation2 + $0x28] sm:$0xff]
    %v43 = vld [vmem:[#allocation2 + $0x30] sm:$0xff]
    %v44 = vld [vmem:[#allocation2 + $0x38] sm:$0xff]
    %v45 = vld [vmem:[#allocation2 + $0x40] sm:$0xff]
    %v46 = vld [vmem:[#allocation2 + $0x48] sm:$0xff]
    %v47 = vld [vmem:[#allocation2 + $0x50] sm:$0xff]
    %v48 = vld [vmem:[#allocation2 + $0x58] sm:$0xff]
    %v49 = vld [vmem:[#allocation2 + $0x60] sm:$0xff]
    %v50 = vld [vmem:[#allocation2 + $0x68] sm:$0xff]
    %v51 = vld [vmem:[#allocation2 + $0x70] sm:$0xff]
    %v52 = vld [vmem:[#allocation2 + $0x78] sm:$0xff]
    %v53 = vld [vmem:[#allocation2 + $0x80] sm:$0xff]
    %v54 = vld [vmem:[#allocation2 + $0x88] sm:$0xff]
    %v55 = vld [vmem:[#allocation2 + $0x90] sm:$0xff]
    %v56 = vld [vmem:[#allocation2 + $0x98] sm:$0xff]
    %v57 = vld [vmem:[#allocation2 + $0xa0] sm:$0xff]
    %v58 = vld [vmem:[#allocation2 + $0xa8] sm:$0xff]
    %v59 = vld [vmem:[#allocation2 + $0xb0] sm:$0xff]
    %v60 = vld [vmem:[#allocation2 + $0xb8] sm:$0xff]
    %v61 = vld [vmem:[#allocation2 + $0xc0] sm:$0xff]
    %v62 = vld [vmem:[#allocation2 + $0xc8] sm:$0xff]
    %v63 = vld [vmem:[#allocation2 + $0xd0] sm:$0xff]
    %v64 = vld [vmem:[#allocation2 + $0xd8] sm:$0xff]
    %v65 = vld [vmem:[#allocation2 + $0xe0] sm:$0xff]
    %v66 = vld [vmem:[#allocation2 + $0xe8] sm:$0xff]
    %v67 = vld [vmem:[#allocation2 + $0xf0] sm:$0xff]
    %v68 = vld [vmem:[#allocation2 + $0xf8] sm:$0xff]
    %v69 = vld [vmem:[#allocation2 + $0x100] sm:$0xff]
    %v70 = vld [vmem:[#allocation2 + $0x108] sm:$0xff]
    %v71 = vld [vmem:[#allocation2 + $0x110] sm:$0xff]
    %v72 = vld [vmem:[#allocation2 + $0x118] sm:$0xff]
    %v73 = vld [vmem:[#allocation2 + $0x120] sm:$0xff]
    %v74 = vld [vmem:[#allocation2 + $0x128] sm:$0xff]
    %v75 = vld [vmem:[#allocation2 + $0x130] sm:$0xff]
    %v76 = vld [vmem:[#allocation2 + $0x138] sm:$0xff]
    %v77 = vld [vmem:[#allocation2 + $0x140] sm:$0xff]
    %v78 = vld [vmem:[#allocation2 + $0x148] sm:$0xff]
    %v79 = vld [vmem:[#allocation2 + $0x150] sm:$0xff]
    %v80 = vld [vmem:[#allocation2 + $0x158] sm:$0xff]
    %v81 = vld [vmem:[#allocation2 + $0x160] sm:$0xff]
    %v82 = vld [vmem:[#allocation2 + $0x168] sm:$0xff]
    %v83 = vld [vmem:[#allocation2 + $0x170] sm:$0xff]
    %v84 = vld [vmem:[#allocation2 + $0x178] sm:$0xff]
    %v85 = vld [vmem:[#allocation2 + $0x180] sm:$0xff]
    %v86 = vld [vmem:[#allocation2 + $0x188] sm:$0xff]
    %v87 = vld [vmem:[#allocation2 + $0x190] sm:$0xff]
    %v88 = vld [vmem:[#allocation2 + $0x198] sm:$0xff]
    %v89 = vld [vmem:[#allocation2 + $0x1a0] sm:$0xff]
    %v90 = vld [vmem:[#allocation2 + $0x1a8] sm:$0xff]
    %v91 = vld [vmem:[#allocation2 + $0x1b0] sm:$0xff]
    %v92 = vld [vmem:[#allocation2 + $0x1b8] sm:$0xff]
    %v93 = vld [vmem:[#allocation2 + $0x1c0] sm:$0xff]
    %v94 = vld [vmem:[#allocation2 + $0x1c8] sm:$0xff]
    %v95 = vld [vmem:[#allocation2 + $0x1d0] sm:$0xff]
    %v96 = vld [vmem:[#allocation2 + $0x1d8] sm:$0xff]
    %v97 = vld [vmem:[#allocation2 + $0x1e0] sm:$0xff]
    %v98 = vld [vmem:[#allocation2 + $0x1e8] sm:$0xff]
    %v99 = vld [vmem:[#allocation2 + $0x1f0] sm:$0xff]
    %v100 = vld [vmem:[#allocation2 + $0x1f8] sm:$0xff]
    %v101 = vld [vmem:[#allocation2 + $0x200] sm:$0xff]
    %v102 = vld [vmem:[#allocation2 + $0x208] sm:$0xff]
    %v103 = vld [vmem:[#allocation2 + $0x210] sm:$0xff]
    %v104 = vld [vmem:[#allocation2 + $0x218] sm:$0xff]
    %v105 = vld [vmem:[#allocation2 + $0x220] sm:$0xff]
    %v106 = vld [vmem:[#allocation2 + $0x228] sm:$0xff]
    %v107 = vld [vmem:[#allocation2 + $0x230] sm:$0xff]
    %v108 = vld [vmem:[#allocation2 + $0x238] sm:$0xff]
    %v109 = vld [vmem:[#allocation2 + $0x240] sm:$0xff]
    %v110 = vld [vmem:[#allocation2 + $0x248] sm:$0xff]
    %v111 = vld [vmem:[#allocation2 + $0x250] sm:$0xff]
    %v112 = vld [vmem:[#allocation2 + $0x258] sm:$0xff]
    %v113 = vld [vmem:[#allocation2 + $0x260] sm:$0xff]
    %v114 = vld [vmem:[#allocation2 + $0x268] sm:$0xff]
    %v115 = vld [vmem:[#allocation2 + $0x270] sm:$0xff]
    %v116 = vld [vmem:[#allocation2 + $0x278] sm:$0xff]
    %v117 = vld [vmem:[#allocation2 + $0x280] sm:$0xff]
    %v118 = vld [vmem:[#allocation2 + $0x288] sm:$0xff]
    %v119 = vld [vmem:[#allocation2 + $0x290] sm:$0xff]
    %v120 = vld [vmem:[#allocation2 + $0x298] sm:$0xff]
    %v121 = vld [vmem:[#allocation2 + $0x2a0] sm:$0xff]
    %v122 = vld [vmem:[#allocation2 + $0x2a8] sm:$0xff]
    %v123 = vld [vmem:[#allocation2 + $0x2b0] sm:$0xff]
    %v124 = vld [vmem:[#allocation2 + $0x2b8] sm:$0xff]
    %v125 = vld [vmem:[#allocation2 + $0x2c0] sm:$0xff]
    %v126 = vld [vmem:[#allocation2 + $0x2c8] sm:$0xff]
    %v127 = vld [vmem:[#allocation2 + $0x2d0] sm:$0xff]
    %v128 = vld [vmem:[#allocation2 + $0x2d8] sm:$0xff]
    %v129 = vld [vmem:[#allocation2 + $0x2e0] sm:$0xff]
    %v130 = vld [vmem:[#allocation2 + $0x2e8] sm:$0xff]
    %v131 = vld [vmem:[#allocation2 + $0x2f0] sm:$0xff]
    %v132 = vld [vmem:[#allocation2 + $0x2f8] sm:$0xff]
    %v133 = vld [vmem:[#allocation2 + $0x300] sm:$0xff]
    %v134 = vld [vmem:[#allocation2 + $0x308] sm:$0xff]
    %v135 = vld [vmem:[#allocation2 + $0x310] sm:$0xff]
    %v136 = vld [vmem:[#allocation2 + $0x318] sm:$0xff]
    %v137 = vld [vmem:[#allocation2 + $0x320] sm:$0xff]
    %v138 = vld [vmem:[#allocation2 + $0x328] sm:$0xff]
    %v139 = vld [vmem:[#allocation2 + $0x330] sm:$0xff]
    %v140 = vld [vmem:[#allocation2 + $0x338] sm:$0xff]
    %v141 = vld [vmem:[#allocation2 + $0x340] sm:$0xff]
    %v142 = vld [vmem:[#allocation2 + $0x348] sm:$0xff]
    %v143 = vld [vmem:[#allocation2 + $0x350] sm:$0xff]
    %v144 = vld [vmem:[#allocation2 + $0x358] sm:$0xff]
    %v145 = vld [vmem:[#allocation2 + $0x360] sm:$0xff]
    %v146 = vld [vmem:[#allocation2 + $0x368] sm:$0xff]
    %v147 = vld [vmem:[#allocation2 + $0x370] sm:$0xff]
    %v148 = vld [vmem:[#allocation2 + $0x378] sm:$0xff]
    %v149 = vld [vmem:[#allocation2 + $0x380] sm:$0xff]
    %v150 = vld [vmem:[#allocation2 + $0x388] sm:$0xff]
    %v151 = vld [vmem:[#allocation2 + $0x390] sm:$0xff]
    %v152 = vld [vmem:[#allocation2 + $0x398] sm:$0xff]
    %v153 = vld [vmem:[#allocation2 + $0x3a0] sm:$0xff]
    %v154 = vld [vmem:[#allocation2 + $0x3a8] sm:$0xff]
    %v155 = vld [vmem:[#allocation2 + $0x3b0] sm:$0xff]
    %v156 = vld [vmem:[#allocation2 + $0x3b8] sm:$0xff]
    %v157 = vld [vmem:[#allocation2 + $0x3c0] sm:$0xff]
    %v158 = vld [vmem:[#allocation2 + $0x3c8] sm:$0xff]
    %v159 = vld [vmem:[#allocation2 + $0x3d0] sm:$0xff]
    %v160 = vld [vmem:[#allocation2 + $0x3d8] sm:$0xff]
    %v161 = vld [vmem:[#allocation2 + $0x3e0] sm:$0xff]
    %v162 = vld [vmem:[#allocation2 + $0x3e8] sm:$0xff]
    %v163 = vld [vmem:[#allocation2 + $0x3f0] sm:$0xff]
    %v164 = vld [vmem:[#allocation2 + $0x3f8] sm:$0xff]
    %v165 = vld [vmem:[%s2] sm:$0xff]
    %167 = vset.pattern.permute.xlu0 0
    %168 = vperm.xlu0 %167, %v165
    %v169 = vpop.permute.xlu0 %168
    %v299 = vunpack.c.l.b16 %v37
    %v300 = vunpack.c.h.b16 %v37
    %v301 = vunpack.c.l.b16 %v38
    %v302 = vunpack.c.h.b16 %v38
    %v303 = vunpack.c.l.b16 %v39
    %v304 = vunpack.c.h.b16 %v39
    %v305 = vunpack.c.l.b16 %v40
    %v306 = vunpack.c.h.b16 %v40
    %v307 = vunpack.c.l.b16 %v41
    %v308 = vunpack.c.h.b16 %v41
    %v309 = vunpack.c.l.b16 %v42
    %v310 = vunpack.c.h.b16 %v42
    %v311 = vunpack.c.l.b16 %v43
    %v312 = vunpack.c.h.b16 %v43
    %v313 = vunpack.c.l.b16 %v44
    %v314 = vunpack.c.h.b16 %v44
    %v315 = vunpack.c.l.b16 %v45
    %v316 = vunpack.c.h.b16 %v45
    %v317 = vunpack.c.l.b16 %v46
    %v318 = vunpack.c.h.b16 %v46
    %v319 = vunpack.c.l.b16 %v47
    %v320 = vunpack.c.h.b16 %v47
    %v321 = vunpack.c.l.b16 %v48
    %v322 = vunpack.c.h.b16 %v48
    %v323 = vunpack.c.l.b16 %v49
    %v324 = vunpack.c.h.b16 %v49
    %v325 = vunpack.c.l.b16 %v50
    %v326 = vunpack.c.h.b16 %v50
    %v327 = vunpack.c.l.b16 %v51
    %v328 = vunpack.c.h.b16 %v51
    %v329 = vunpack.c.l.b16 %v52
    %v330 = vunpack.c.h.b16 %v52
    %v331 = vunpack.c.l.b16 %v53
    %v332 = vunpack.c.h.b16 %v53
    %v333 = vunpack.c.l.b16 %v54
    %v334 = vunpack.c.h.b16 %v54
    %v335 = vunpack.c.l.b16 %v55
    %v336 = vunpack.c.h.b16 %v55
    %v337 = vunpack.c.l.b16 %v56
    %v338 = vunpack.c.h.b16 %v56
    %v339 = vunpack.c.l.b16 %v57
    %v340 = vunpack.c.h.b16 %v57
    %v341 = vunpack.c.l.b16 %v58
    %v342 = vunpack.c.h.b16 %v58
    %v343 = vunpack.c.l.b16 %v59
    %v344 = vunpack.c.h.b16 %v59
    %v345 = vunpack.c.l.b16 %v60
    %v346 = vunpack.c.h.b16 %v60
    %v347 = vunpack.c.l.b16 %v61
    %v348 = vunpack.c.h.b16 %v61
    %v349 = vunpack.c.l.b16 %v62
    %v350 = vunpack.c.h.b16 %v62
    %v351 = vunpack.c.l.b16 %v63
    %v352 = vunpack.c.h.b16 %v63
    %v353 = vunpack.c.l.b16 %v64
    %v354 = vunpack.c.h.b16 %v64
    %v355 = vunpack.c.l.b16 %v65
    %v356 = vunpack.c.h.b16 %v65
    %v357 = vunpack.c.l.b16 %v66
    %v358 = vunpack.c.h.b16 %v66
    %v359 = vunpack.c.l.b16 %v67
    %v360 = vunpack.c.h.b16 %v67
    %v361 = vunpack.c.l.b16 %v68
    %v362 = vunpack.c.h.b16 %v68
    %v363 = vunpack.c.l.b16 %v69
    %v364 = vunpack.c.h.b16 %v69
    %v365 = vunpack.c.l.b16 %v70
    %v366 = vunpack.c.h.b16 %v70
    %v367 = vunpack.c.l.b16 %v71
    %v368 = vunpack.c.h.b16 %v71
    %v369 = vunpack.c.l.b16 %v72
    %v370 = vunpack.c.h.b16 %v72
    %v371 = vunpack.c.l.b16 %v73
    %v372 = vunpack.c.h.b16 %v73
    %v373 = vunpack.c.l.b16 %v74
    %v374 = vunpack.c.h.b16 %v74
    %v375 = vunpack.c.l.b16 %v75
    %v376 = vunpack.c.h.b16 %v75
    %v377 = vunpack.c.l.b16 %v76
    %v378 = vunpack.c.h.b16 %v76
    %v379 = vunpack.c.l.b16 %v77
    %v380 = vunpack.c.h.b16 %v77
    %v381 = vunpack.c.l.b16 %v78
    %v382 = vunpack.c.h.b16 %v78
    %v383 = vunpack.c.l.b16 %v79
    %v384 = vunpack.c.h.b16 %v79
    %v385 = vunpack.c.l.b16 %v80
    %v386 = vunpack.c.h.b16 %v80
    %v387 = vunpack.c.l.b16 %v81
    %v388 = vunpack.c.h.b16 %v81
    %v389 = vunpack.c.l.b16 %v82
    %v390 = vunpack.c.h.b16 %v82
    %v391 = vunpack.c.l.b16 %v83
    %v392 = vunpack.c.h.b16 %v83
    %v393 = vunpack.c.l.b16 %v84
    %v394 = vunpack.c.h.b16 %v84
    %v395 = vunpack.c.l.b16 %v85
    %v396 = vunpack.c.h.b16 %v85
    %v397 = vunpack.c.l.b16 %v86
    %v398 = vunpack.c.h.b16 %v86
    %v399 = vunpack.c.l.b16 %v87
    %v400 = vunpack.c.h.b16 %v87
    %v401 = vunpack.c.l.b16 %v88
    %v402 = vunpack.c.h.b16 %v88
    %v403 = vunpack.c.l.b16 %v89
    %v404 = vunpack.c.h.b16 %v89
    %v405 = vunpack.c.l.b16 %v90
    %v406 = vunpack.c.h.b16 %v90
    %v407 = vunpack.c.l.b16 %v91
    %v408 = vunpack.c.h.b16 %v91
    %v409 = vunpack.c.l.b16 %v92
    %v410 = vunpack.c.h.b16 %v92
    %v411 = vunpack.c.l.b16 %v93
    %v412 = vunpack.c.h.b16 %v93
    %v413 = vunpack.c.l.b16 %v94
    %v414 = vunpack.c.h.b16 %v94
    %v415 = vunpack.c.l.b16 %v95
    %v416 = vunpack.c.h.b16 %v95
    %v417 = vunpack.c.l.b16 %v96
    %v418 = vunpack.c.h.b16 %v96
    %v419 = vunpack.c.l.b16 %v97
    %v420 = vunpack.c.h.b16 %v97
    %v421 = vunpack.c.l.b16 %v98
    %v422 = vunpack.c.h.b16 %v98
    %v423 = vunpack.c.l.b16 %v99
    %v424 = vunpack.c.h.b16 %v99
    %v425 = vunpack.c.l.b16 %v100
    %v426 = vunpack.c.h.b16 %v100
    %v427 = vunpack.c.l.b16 %v101
    %v428 = vunpack.c.h.b16 %v101
    %v429 = vunpack.c.l.b16 %v102
    %v430 = vunpack.c.h.b16 %v102
    %v431 = vunpack.c.l.b16 %v103
    %v432 = vunpack.c.h.b16 %v103
    %v433 = vunpack.c.l.b16 %v104
    %v434 = vunpack.c.h.b16 %v104
    %v435 = vunpack.c.l.b16 %v105
    %v436 = vunpack.c.h.b16 %v105
    %v437 = vunpack.c.l.b16 %v106
    %v438 = vunpack.c.h.b16 %v106
    %v439 = vunpack.c.l.b16 %v107
    %v440 = vunpack.c.h.b16 %v107
    %v441 = vunpack.c.l.b16 %v108
    %v442 = vunpack.c.h.b16 %v108
    %v443 = vunpack.c.l.b16 %v109
    %v444 = vunpack.c.h.b16 %v109
    %v445 = vunpack.c.l.b16 %v110
    %v446 = vunpack.c.h.b16 %v110
    %v447 = vunpack.c.l.b16 %v111
    %v448 = vunpack.c.h.b16 %v111
    %v449 = vunpack.c.l.b16 %v112
    %v450 = vunpack.c.h.b16 %v112
    %v451 = vunpack.c.l.b16 %v113
    %v452 = vunpack.c.h.b16 %v113
    %v453 = vunpack.c.l.b16 %v114
    %v454 = vunpack.c.h.b16 %v114
    %v455 = vunpack.c.l.b16 %v115
    %v456 = vunpack.c.h.b16 %v115
    %v457 = vunpack.c.l.b16 %v116
    %v458 = vunpack.c.h.b16 %v116
    %v459 = vunpack.c.l.b16 %v117
    %v460 = vunpack.c.h.b16 %v117
    %v461 = vunpack.c.l.b16 %v118
    %v462 = vunpack.c.h.b16 %v118
    %v463 = vunpack.c.l.b16 %v119
    %v464 = vunpack.c.h.b16 %v119
    %v465 = vunpack.c.l.b16 %v120
    %v466 = vunpack.c.h.b16 %v120
    %v467 = vunpack.c.l.b16 %v121
    %v468 = vunpack.c.h.b16 %v121
    %v469 = vunpack.c.l.b16 %v122
    %v470 = vunpack.c.h.b16 %v122
    %v471 = vunpack.c.l.b16 %v123
    %v472 = vunpack.c.h.b16 %v123
    %v473 = vunpack.c.l.b16 %v124
    %v474 = vunpack.c.h.b16 %v124
    %v475 = vunpack.c.l.b16 %v125
    %v476 = vunpack.c.h.b16 %v125
    %v477 = vunpack.c.l.b16 %v126
    %v478 = vunpack.c.h.b16 %v126
    %v479 = vunpack.c.l.b16 %v127
    %v480 = vunpack.c.h.b16 %v127
    %v481 = vunpack.c.l.b16 %v128
    %v482 = vunpack.c.h.b16 %v128
    %v483 = vunpack.c.l.b16 %v129
    %v484 = vunpack.c.h.b16 %v129
    %v485 = vunpack.c.l.b16 %v130
    %v486 = vunpack.c.h.b16 %v130
    %v487 = vunpack.c.l.b16 %v131
    %v488 = vunpack.c.h.b16 %v131
    %v489 = vunpack.c.l.b16 %v132
    %v490 = vunpack.c.h.b16 %v132
    %v491 = vunpack.c.l.b16 %v133
    %v492 = vunpack.c.h.b16 %v133
    %v493 = vunpack.c.l.b16 %v134
    %v494 = vunpack.c.h.b16 %v134
    %v495 = vunpack.c.l.b16 %v135
    %v496 = vunpack.c.h.b16 %v135
    %v497 = vunpack.c.l.b16 %v136
    %v498 = vunpack.c.h.b16 %v136
    %v499 = vunpack.c.l.b16 %v137
    %v500 = vunpack.c.h.b16 %v137
    %v501 = vunpack.c.l.b16 %v138
    %v502 = vunpack.c.h.b16 %v138
    %v503 = vunpack.c.l.b16 %v139
    %v504 = vunpack.c.h.b16 %v139
    %v505 = vunpack.c.l.b16 %v140
    %v506 = vunpack.c.h.b16 %v140
    %v507 = vunpack.c.l.b16 %v141
    %v508 = vunpack.c.h.b16 %v141
    %v509 = vunpack.c.l.b16 %v142
    %v510 = vunpack.c.h.b16 %v142
    %v511 = vunpack.c.l.b16 %v143
    %v512 = vunpack.c.h.b16 %v143
    %v513 = vunpack.c.l.b16 %v144
    %v514 = vunpack.c.h.b16 %v144
    %v515 = vunpack.c.l.b16 %v145
    %v516 = vunpack.c.h.b16 %v145
    %v517 = vunpack.c.l.b16 %v146
    %v518 = vunpack.c.h.b16 %v146
    %v519 = vunpack.c.l.b16 %v147
    %v520 = vunpack.c.h.b16 %v147
    %v521 = vunpack.c.l.b16 %v148
    %v522 = vunpack.c.h.b16 %v148
    %v523 = vunpack.c.l.b16 %v149
    %v524 = vunpack.c.h.b16 %v149
    %v525 = vunpack.c.l.b16 %v150
    %v526 = vunpack.c.h.b16 %v150
    %v527 = vunpack.c.l.b16 %v151
    %v528 = vunpack.c.h.b16 %v151
    %v529 = vunpack.c.l.b16 %v152
    %v530 = vunpack.c.h.b16 %v152
    %v531 = vunpack.c.l.b16 %v153
    %v532 = vunpack.c.h.b16 %v153
    %v533 = vunpack.c.l.b16 %v154
    %v534 = vunpack.c.h.b16 %v154
    %v535 = vunpack.c.l.b16 %v155
    %v536 = vunpack.c.h.b16 %v155
    %v537 = vunpack.c.l.b16 %v156
    %v538 = vunpack.c.h.b16 %v156
    %v539 = vunpack.c.l.b16 %v157
    %v540 = vunpack.c.h.b16 %v157
    %v541 = vunpack.c.l.b16 %v158
    %v542 = vunpack.c.h.b16 %v158
    %v543 = vunpack.c.l.b16 %v159
    %v544 = vunpack.c.h.b16 %v159
    %v545 = vunpack.c.l.b16 %v160
    %v546 = vunpack.c.h.b16 %v160
    %v547 = vunpack.c.l.b16 %v161
    %v548 = vunpack.c.h.b16 %v161
    %v549 = vunpack.c.l.b16 %v162
    %v550 = vunpack.c.h.b16 %v162
    %v551 = vunpack.c.l.b16 %v163
    %v552 = vunpack.c.h.b16 %v163
    %v553 = vunpack.c.l.b16 %v164
    %v554 = vunpack.c.h.b16 %v164
    %v555 = vpack.c.b16 %v363, %v299
    %v556 = vpack.c.b16 %v364, %v300
    %v557 = vpack.c.b16 %v365, %v301
    %v558 = vpack.c.b16 %v366, %v302
    %v559 = vpack.c.b16 %v367, %v303
    %v560 = vpack.c.b16 %v368, %v304
    %v561 = vpack.c.b16 %v369, %v305
    %v562 = vpack.c.b16 %v370, %v306
    %v563 = vpack.c.b16 %v371, %v307
    %v564 = vpack.c.b16 %v372, %v308
    %v565 = vpack.c.b16 %v373, %v309
    %v566 = vpack.c.b16 %v374, %v310
    %v567 = vpack.c.b16 %v375, %v311
    %v568 = vpack.c.b16 %v376, %v312
    %v569 = vpack.c.b16 %v377, %v313
    %v570 = vpack.c.b16 %v378, %v314
    %v571 = vpack.c.b16 %v379, %v315
    %v572 = vpack.c.b16 %v380, %v316
    %v573 = vpack.c.b16 %v381, %v317
    %v574 = vpack.c.b16 %v382, %v318
    %v575 = vpack.c.b16 %v383, %v319
    %v576 = vpack.c.b16 %v384, %v320
    %v577 = vpack.c.b16 %v385, %v321
    %v578 = vpack.c.b16 %v386, %v322
    %v579 = vpack.c.b16 %v387, %v323
    %v580 = vpack.c.b16 %v388, %v324
    %v581 = vpack.c.b16 %v389, %v325
    %v582 = vpack.c.b16 %v390, %v326
    %v583 = vpack.c.b16 %v391, %v327
    %v584 = vpack.c.b16 %v392, %v328
    %v585 = vpack.c.b16 %v393, %v329
    %v586 = vpack.c.b16 %v394, %v330
    %v587 = vpack.c.b16 %v395, %v331
    %v588 = vpack.c.b16 %v396, %v332
    %v589 = vpack.c.b16 %v397, %v333
    %v590 = vpack.c.b16 %v398, %v334
    %v591 = vpack.c.b16 %v399, %v335
    %v592 = vpack.c.b16 %v400, %v336
    %v593 = vpack.c.b16 %v401, %v337
    %v594 = vpack.c.b16 %v402, %v338
    %v595 = vpack.c.b16 %v403, %v339
    %v596 = vpack.c.b16 %v404, %v340
    %v597 = vpack.c.b16 %v405, %v341
    %v598 = vpack.c.b16 %v406, %v342
    %v599 = vpack.c.b16 %v407, %v343
    %v600 = vpack.c.b16 %v408, %v344
    %v601 = vpack.c.b16 %v409, %v345
    %v602 = vpack.c.b16 %v410, %v346
    %v603 = vpack.c.b16 %v411, %v347
    %v604 = vpack.c.b16 %v412, %v348
    %v605 = vpack.c.b16 %v413, %v349
    %v606 = vpack.c.b16 %v414, %v350
    %v607 = vpack.c.b16 %v415, %v351
    %v608 = vpack.c.b16 %v416, %v352
    %v609 = vpack.c.b16 %v417, %v353
    %v610 = vpack.c.b16 %v418, %v354
    %v611 = vpack.c.b16 %v419, %v355
    %v612 = vpack.c.b16 %v420, %v356
    %v613 = vpack.c.b16 %v421, %v357
    %v614 = vpack.c.b16 %v422, %v358
    %v615 = vpack.c.b16 %v423, %v359
    %v616 = vpack.c.b16 %v424, %v360
    %v617 = vpack.c.b16 %v425, %v361
    %v618 = vpack.c.b16 %v426, %v362
    %v619 = vpack.c.b16 %v491, %v427
    %v620 = vpack.c.b16 %v492, %v428
    %v621 = vpack.c.b16 %v493, %v429
    %v622 = vpack.c.b16 %v494, %v430
    %v623 = vpack.c.b16 %v495, %v431
    %v624 = vpack.c.b16 %v496, %v432
    %v625 = vpack.c.b16 %v497, %v433
    %v626 = vpack.c.b16 %v498, %v434
    %v627 = vpack.c.b16 %v499, %v435
    %v628 = vpack.c.b16 %v500, %v436
    %v629 = vpack.c.b16 %v501, %v437
    %v630 = vpack.c.b16 %v502, %v438
    %v631 = vpack.c.b16 %v503, %v439
    %v632 = vpack.c.b16 %v504, %v440
    %v633 = vpack.c.b16 %v505, %v441
    %v634 = vpack.c.b16 %v506, %v442
    %v635 = vpack.c.b16 %v507, %v443
    %v636 = vpack.c.b16 %v508, %v444
    %v637 = vpack.c.b16 %v509, %v445
    %v638 = vpack.c.b16 %v510, %v446
    %v639 = vpack.c.b16 %v511, %v447
    %v640 = vpack.c.b16 %v512, %v448
    %v641 = vpack.c.b16 %v513, %v449
    %v642 = vpack.c.b16 %v514, %v450
    %v643 = vpack.c.b16 %v515, %v451
    %v644 = vpack.c.b16 %v516, %v452
    %v645 = vpack.c.b16 %v517, %v453
    %v646 = vpack.c.b16 %v518, %v454
    %v647 = vpack.c.b16 %v519, %v455
    %v648 = vpack.c.b16 %v520, %v456
    %v649 = vpack.c.b16 %v521, %v457
    %v650 = vpack.c.b16 %v522, %v458
    %v651 = vpack.c.b16 %v523, %v459
    %v652 = vpack.c.b16 %v524, %v460
    %v653 = vpack.c.b16 %v525, %v461
    %v654 = vpack.c.b16 %v526, %v462
    %v655 = vpack.c.b16 %v527, %v463
    %v656 = vpack.c.b16 %v528, %v464
    %v657 = vpack.c.b16 %v529, %v465
    %v658 = vpack.c.b16 %v530, %v466
    %v659 = vpack.c.b16 %v531, %v467
    %v660 = vpack.c.b16 %v532, %v468
    %v661 = vpack.c.b16 %v533, %v469
    %v662 = vpack.c.b16 %v534, %v470
    %v663 = vpack.c.b16 %v535, %v471
    %v664 = vpack.c.b16 %v536, %v472
    %v665 = vpack.c.b16 %v537, %v473
    %v666 = vpack.c.b16 %v538, %v474
    %v667 = vpack.c.b16 %v539, %v475
    %v668 = vpack.c.b16 %v540, %v476
    %v669 = vpack.c.b16 %v541, %v477
    %v670 = vpack.c.b16 %v542, %v478
    %v671 = vpack.c.b16 %v543, %v479
    %v672 = vpack.c.b16 %v544, %v480
    %v673 = vpack.c.b16 %v545, %v481
    %v674 = vpack.c.b16 %v546, %v482
    %v675 = vpack.c.b16 %v547, %v483
    %v676 = vpack.c.b16 %v548, %v484
    %v677 = vpack.c.b16 %v549, %v485
    %v678 = vpack.c.b16 %v550, %v486
    %v679 = vpack.c.b16 %v551, %v487
    %v680 = vpack.c.b16 %v552, %v488
    %v681 = vpack.c.b16 %v553, %v489
    %v682 = vpack.c.b16 %v554, %v490
    %vm811 = vcmask 261120
    %v813 = vsel %vm811, %v36, 0
    %815 = vmatprep.subr.bf16.mxu0 0
    %816 = vmatpush1.bf16.msra.mxu0 0
    %817 = vmatprep.subr.bf16.mxu0 0
    %818 = vmatpush1.bf16.msra.mxu0 0
    %819 = vmatprep.subr.bf16.mxu0 0
    %820 = vmatpush1.bf16.msra.mxu0 0
    %821 = vmatprep.subr.bf16.mxu0 0
    %822 = vmatpush1.bf16.msra.mxu0 0
    %823 = vmatprep.subr.bf16.mxu0 0
    %824 = vmatpush1.bf16.msra.mxu0 0
    %825 = vmatprep.subr.bf16.mxu0 0
    %826 = vmatpush1.bf16.msra.mxu0 0
    %827 = vmatprep.subr.bf16.mxu0 %v620
    %828 = vmatpush1.bf16.msra.mxu0 %v619
    %829 = vmatprep.subr.bf16.mxu0 %v556
    %830 = vmatpush1.bf16.msra.mxu0 %v555
    %831 = vmatprep.subr.bf16.mxu0 0
    %832 = vmatpush2.bf16.msra.mxu0 0
    %833 = vmatprep.subr.bf16.mxu0 0
    %834 = vmatpush2.bf16.msra.mxu0 0
    %835 = vmatprep.subr.bf16.mxu0 0
    %836 = vmatpush2.bf16.msra.mxu0 0
    %837 = vmatprep.subr.bf16.mxu0 0
    %838 = vmatpush2.bf16.msra.mxu0 0
    %839 = vmatprep.subr.bf16.mxu0 0
    %840 = vmatpush2.bf16.msra.mxu0 0
    %841 = vmatprep.subr.bf16.mxu0 0
    %842 = vmatpush2.bf16.msra.mxu0 0
    %843 = vmatprep.subr.bf16.mxu0 0
    %844 = vmatpush2.bf16.msra.mxu0 0
    %845 = vmatprep.subr.bf16.mxu0 0
    %846 = vmatpush2.bf16.msra.mxu0 0
    %847 = vmatprep.mubr.bf16.mxu0 0
    %848 = vmatmul.mubr.bf16.gmra.mxu0 %v813
    %v849 = vpop.f32.mrf.mxu0
    %v850 = vadd.f32 %v169, %v849
    %v851 = vpop.f32.mrf.mxu0
    %v852 = vadd.f32 %v169, %v851
    %v853 = vpop.f32.mrf.mxu0
    %v854 = vpop.f32.mrf.mxu0
    %855 = vdwg.mxu0
    %856 = vmatprep.subr.bf16.mxu0 0
    %857 = vmatpush1.bf16.msra.mxu0 0
    %858 = vmatprep.subr.bf16.mxu0 0
    %859 = vmatpush1.bf16.msra.mxu0 0
    %860 = vmatprep.subr.bf16.mxu0 0
    %861 = vmatpush1.bf16.msra.mxu0 0
    %862 = vmatprep.subr.bf16.mxu0 0
    %863 = vmatpush1.bf16.msra.mxu0 0
    %864 = vmatprep.subr.bf16.mxu0 0
    %865 = vmatpush1.bf16.msra.mxu0 0
    %866 = vmatprep.subr.bf16.mxu0 0
    %867 = vmatpush1.bf16.msra.mxu0 0
    %868 = vmatprep.subr.bf16.mxu0 %v622
    %869 = vmatpush1.bf16.msra.mxu0 %v621
    %870 = vmatprep.subr.bf16.mxu0 %v558
    %871 = vmatpush1.bf16.msra.mxu0 %v557
    %872 = vmatprep.subr.bf16.mxu0 0
    %873 = vmatpush2.bf16.msra.mxu0 0
    %874 = vmatprep.subr.bf16.mxu0 0
    %875 = vmatpush2.bf16.msra.mxu0 0
    %876 = vmatprep.subr.bf16.mxu0 0
    %877 = vmatpush2.bf16.msra.mxu0 0
    %878 = vmatprep.subr.bf16.mxu0 0
    %879 = vmatpush2.bf16.msra.mxu0 0
    %880 = vmatprep.subr.bf16.mxu0 0
    %881 = vmatpush2.bf16.msra.mxu0 0
    %882 = vmatprep.subr.bf16.mxu0 0
    %883 = vmatpush2.bf16.msra.mxu0 0
    %884 = vmatprep.subr.bf16.mxu0 0
    %885 = vmatpush2.bf16.msra.mxu0 0
    %886 = vmatprep.subr.bf16.mxu0 0
    %887 = vmatpush2.bf16.msra.mxu0 0
    %888 = vmatprep.mubr.bf16.mxu0 0
    %889 = vmatmul.mubr.bf16.gmra.mxu0 %v813
    %v890 = vpop.f32.mrf.mxu0
    %v891 = vadd.f32 %v169, %v890
    %v892 = vpop.f32.mrf.mxu0
    %v893 = vadd.f32 %v169, %v892
    %v894 = vpop.f32.mrf.mxu0
    %v895 = vpop.f32.mrf.mxu0
    %896 = vdwg.mxu0
    %897 = vmatprep.subr.bf16.mxu0 0
    %898 = vmatpush1.bf16.msra.mxu0 0
    %899 = vmatprep.subr.bf16.mxu0 0
    %900 = vmatpush1.bf16.msra.mxu0 0
    %901 = vmatprep.subr.bf16.mxu0 0
    %902 = vmatpush1.bf16.msra.mxu0 0
    %903 = vmatprep.subr.bf16.mxu0 0
    %904 = vmatpush1.bf16.msra.mxu0 0
    %905 = vmatprep.subr.bf16.mxu0 0
    %906 = vmatpush1.bf16.msra.mxu0 0
    %907 = vmatprep.subr.bf16.mxu0 0
    %908 = vmatpush1.bf16.msra.mxu0 0
    %909 = vmatprep.subr.bf16.mxu0 %v624
    %910 = vmatpush1.bf16.msra.mxu0 %v623
    %911 = vmatprep.subr.bf16.mxu0 %v560
    %912 = vmatpush1.bf16.msra.mxu0 %v559
    %913 = vmatprep.subr.bf16.mxu0 0
    %914 = vmatpush2.bf16.msra.mxu0 0
    %915 = vmatprep.subr.bf16.mxu0 0
    %916 = vmatpush2.bf16.msra.mxu0 0
    %917 = vmatprep.subr.bf16.mxu0 0
    %918 = vmatpush2.bf16.msra.mxu0 0
    %919 = vmatprep.subr.bf16.mxu0 0
    %920 = vmatpush2.bf16.msra.mxu0 0
    %921 = vmatprep.subr.bf16.mxu0 0
    %922 = vmatpush2.bf16.msra.mxu0 0
    %923 = vmatprep.subr.bf16.mxu0 0
    %924 = vmatpush2.bf16.msra.mxu0 0
    %925 = vmatprep.subr.bf16.mxu0 0
    %926 = vmatpush2.bf16.msra.mxu0 0
    %927 = vmatprep.subr.bf16.mxu0 0
    %928 = vmatpush2.bf16.msra.mxu0 0
    %929 = vmatprep.mubr.bf16.mxu0 0
    %930 = vmatmul.mubr.bf16.gmra.mxu0 %v813
    %v931 = vpop.f32.mrf.mxu0
    %v932 = vadd.f32 %v169, %v931
    %v933 = vpop.f32.mrf.mxu0
    %v934 = vadd.f32 %v169, %v933
    %v935 = vpop.f32.mrf.mxu0
    %v936 = vpop.f32.mrf.mxu0
    %937 = vdwg.mxu0
    %938 = vmatprep.subr.bf16.mxu0 0
    %939 = vmatpush1.bf16.msra.mxu0 0
    %940 = vmatprep.subr.bf16.mxu0 0
    %941 = vmatpush1.bf16.msra.mxu0 0
    %942 = vmatprep.subr.bf16.mxu0 0
    %943 = vmatpush1.bf16.msra.mxu0 0
    %944 = vmatprep.subr.bf16.mxu0 0
    %945 = vmatpush1.bf16.msra.mxu0 0
    %946 = vmatprep.subr.bf16.mxu0 0
    %947 = vmatpush1.bf16.msra.mxu0 0
    %948 = vmatprep.subr.bf16.mxu0 0
    %949 = vmatpush1.bf16.msra.mxu0 0
    %950 = vmatprep.subr.bf16.mxu0 %v626
    %951 = vmatpush1.bf16.msra.mxu0 %v625
    %952 = vmatprep.subr.bf16.mxu0 %v562
    %953 = vmatpush1.bf16.msra.mxu0 %v561
    %954 = vmatprep.subr.bf16.mxu0 0
    %955 = vmatpush2.bf16.msra.mxu0 0
    %956 = vmatprep.subr.bf16.mxu0 0
    %957 = vmatpush2.bf16.msra.mxu0 0
    %958 = vmatprep.subr.bf16.mxu0 0
    %959 = vmatpush2.bf16.msra.mxu0 0
    %960 = vmatprep.subr.bf16.mxu0 0
    %961 = vmatpush2.bf16.msra.mxu0 0
    %962 = vmatprep.subr.bf16.mxu0 0
    %963 = vmatpush2.bf16.msra.mxu0 0
    %964 = vmatprep.subr.bf16.mxu0 0
    %965 = vmatpush2.bf16.msra.mxu0 0
    %966 = vmatprep.subr.bf16.mxu0 0
    %967 = vmatpush2.bf16.msra.mxu0 0
    %968 = vmatprep.subr.bf16.mxu0 0
    %969 = vmatpush2.bf16.msra.mxu0 0
    %970 = vmatprep.mubr.bf16.mxu0 0
    %971 = vmatmul.mubr.bf16.gmra.mxu0 %v813
    %v972 = vpop.f32.mrf.mxu0
    %v973 = vadd.f32 %v169, %v972
    %v974 = vpop.f32.mrf.mxu0
    %v975 = vadd.f32 %v169, %v974
    %v976 = vpop.f32.mrf.mxu0
    %v977 = vpop.f32.mrf.mxu0
    %978 = vdwg.mxu0
    %979 = vmatprep.subr.bf16.mxu0 0
    %980 = vmatpush1.bf16.msra.mxu0 0
    %981 = vmatprep.subr.bf16.mxu0 0
    %982 = vmatpush1.bf16.msra.mxu0 0
    %983 = vmatprep.subr.bf16.mxu0 0
    %984 = vmatpush1.bf16.msra.mxu0 0
    %985 = vmatprep.subr.bf16.mxu0 0
    %986 = vmatpush1.bf16.msra.mxu0 0
    %987 = vmatprep.subr.bf16.mxu0 0
    %988 = vmatpush1.bf16.msra.mxu0 0
    %989 = vmatprep.subr.bf16.mxu0 0
    %990 = vmatpush1.bf16.msra.mxu0 0
    %991 = vmatprep.subr.bf16.mxu0 %v628
    %992 = vmatpush1.bf16.msra.mxu0 %v627
    %993 = vmatprep.subr.bf16.mxu0 %v564
    %994 = vmatpush1.bf16.msra.mxu0 %v563
    %995 = vmatprep.subr.bf16.mxu0 0
    %996 = vmatpush2.bf16.msra.mxu0 0
    %997 = vmatprep.subr.bf16.mxu0 0
    %998 = vmatpush2.bf16.msra.mxu0 0
    %999 = vmatprep.subr.bf16.mxu0 0
    %1000 = vmatpush2.bf16.msra.mxu0 0
    %1001 = vmatprep.subr.bf16.mxu0 0
    %1002 = vmatpush2.bf16.msra.mxu0 0
    %1003 = vmatprep.subr.bf16.mxu0 0
    %1004 = vmatpush2.bf16.msra.mxu0 0
    %1005 = vmatprep.subr.bf16.mxu0 0
    %1006 = vmatpush2.bf16.msra.mxu0 0
    %1007 = vmatprep.subr.bf16.mxu0 0
    %1008 = vmatpush2.bf16.msra.mxu0 0
    %1009 = vmatprep.subr.bf16.mxu0 0
    %1010 = vmatpush2.bf16.msra.mxu0 0
    %1011 = vmatprep.mubr.bf16.mxu0 0
    %1012 = vmatmul.mubr.bf16.gmra.mxu0 %v813
    %v1013 = vpop.f32.mrf.mxu0
    %v1014 = vadd.f32 %v169, %v1013
    %v1015 = vpop.f32.mrf.mxu0
    %v1016 = vadd.f32 %v169, %v1015
    %v1017 = vpop.f32.mrf.mxu0
    %v1018 = vpop.f32.mrf.mxu0
    %1019 = vdwg.mxu0
    %1020 = vmatprep.subr.bf16.mxu0 0
    %1021 = vmatpush1.bf16.msra.mxu0 0
    %1022 = vmatprep.subr.bf16.mxu0 0
    %1023 = vmatpush1.bf16.msra.mxu0 0
    %1024 = vmatprep.subr.bf16.mxu0 0
    %1025 = vmatpush1.bf16.msra.mxu0 0
    %1026 = vmatprep.subr.bf16.mxu0 0
    %1027 = vmatpush1.bf16.msra.mxu0 0
    %1028 = vmatprep.subr.bf16.mxu0 0
    %1029 = vmatpush1.bf16.msra.mxu0 0
    %1030 = vmatprep.subr.bf16.mxu0 0
    %1031 = vmatpush1.bf16.msra.mxu0 0
    %1032 = vmatprep.subr.bf16.mxu0 %v630
    %1033 = vmatpush1.bf16.msra.mxu0 %v629
    %1034 = vmatprep.subr.bf16.mxu0 %v566
    %1035 = vmatpush1.bf16.msra.mxu0 %v565
    %1036 = vmatprep.subr.bf16.mxu0 0
    %1037 = vmatpush2.bf16.msra.mxu0 0
    %1038 = vmatprep.subr.bf16.mxu0 0
    %1039 = vmatpush2.bf16.msra.mxu0 0
    %1040 = vmatprep.subr.bf16.mxu0 0
    %1041 = vmatpush2.bf16.msra.mxu0 0
    %1042 = vmatprep.subr.bf16.mxu0 0
    %1043 = vmatpush2.bf16.msra.mxu0 0
    %1044 = vmatprep.subr.bf16.mxu0 0
    %1045 = vmatpush2.bf16.msra.mxu0 0
    %1046 = vmatprep.subr.bf16.mxu0 0
    %1047 = vmatpush2.bf16.msra.mxu0 0
    %1048 = vmatprep.subr.bf16.mxu0 0
    %1049 = vmatpush2.bf16.msra.mxu0 0
    %1050 = vmatprep.subr.bf16.mxu0 0
    %1051 = vmatpush2.bf16.msra.mxu0 0
    %1052 = vmatprep.mubr.bf16.mxu0 0
    %1053 = vmatmul.mubr.bf16.gmra.mxu0 %v813
    %v1054 = vpop.f32.mrf.mxu0
    %v1055 = vadd.f32 %v169, %v1054
    %v1056 = vpop.f32.mrf.mxu0
    %v1057 = vadd.f32 %v169, %v1056
    %v1058 = vpop.f32.mrf.mxu0
    %v1059 = vpop.f32.mrf.mxu0
    %1060 = vdwg.mxu0
    %1061 = vmatprep.subr.bf16.mxu0 0
    %1062 = vmatpush1.bf16.msra.mxu0 0
    %1063 = vmatprep.subr.bf16.mxu0 0
    %1064 = vmatpush1.bf16.msra.mxu0 0
    %1065 = vmatprep.subr.bf16.mxu0 0
    %1066 = vmatpush1.bf16.msra.mxu0 0
    %1067 = vmatprep.subr.bf16.mxu0 0
    %1068 = vmatpush1.bf16.msra.mxu0 0
    %1069 = vmatprep.subr.bf16.mxu0 0
    %1070 = vmatpush1.bf16.msra.mxu0 0
    %1071 = vmatprep.subr.bf16.mxu0 0
    %1072 = vmatpush1.bf16.msra.mxu0 0
    %1073 = vmatprep.subr.bf16.mxu0 %v632
    %1074 = vmatpush1.bf16.msra.mxu0 %v631
    %1075 = vmatprep.subr.bf16.mxu0 %v568
    %1076 = vmatpush1.bf16.msra.mxu0 %v567
    %1077 = vmatprep.subr.bf16.mxu0 0
    %1078 = vmatpush2.bf16.msra.mxu0 0
    %1079 = vmatprep.subr.bf16.mxu0 0
    %1080 = vmatpush2.bf16.msra.mxu0 0
    %1081 = vmatprep.subr.bf16.mxu0 0
    %1082 = vmatpush2.bf16.msra.mxu0 0
    %1083 = vmatprep.subr.bf16.mxu0 0
    %1084 = vmatpush2.bf16.msra.mxu0 0
    %1085 = vmatprep.subr.bf16.mxu0 0
    %1086 = vmatpush2.bf16.msra.mxu0 0
    %1087 = vmatprep.subr.bf16.mxu0 0
    %1088 = vmatpush2.bf16.msra.mxu0 0
    %1089 = vmatprep.subr.bf16.mxu0 0
    %1090 = vmatpush2.bf16.msra.mxu0 0
    %1091 = vmatprep.subr.bf16.mxu0 0
    %1092 = vmatpush2.bf16.msra.mxu0 0
    %1093 = vmatprep.mubr.bf16.mxu0 0
    %1094 = vmatmul.mubr.bf16.gmra.mxu0 %v813
    %v1095 = vpop.f32.mrf.mxu0
    %v1096 = vadd.f32 %v169, %v1095
    %v1097 = vpop.f32.mrf.mxu0
    %v1098 = vadd.f32 %v169, %v1097
    %v1099 = vpop.f32.mrf.mxu0
    %v1100 = vpop.f32.mrf.mxu0
    %1101 = vdwg.mxu0
    %1102 = vmatprep.subr.bf16.mxu0 0
    %1103 = vmatpush1.bf16.msra.mxu0 0
    %1104 = vmatprep.subr.bf16.mxu0 0
    %1105 = vmatpush1.bf16.msra.mxu0 0
    %1106 = vmatprep.subr.bf16.mxu0 0
    %1107 = vmatpush1.bf16.msra.mxu0 0
    %1108 = vmatprep.subr.bf16.mxu0 0
    %1109 = vmatpush1.bf16.msra.mxu0 0
    %1110 = vmatprep.subr.bf16.mxu0 0
    %1111 = vmatpush1.bf16.msra.mxu0 0
    %1112 = vmatprep.subr.bf16.mxu0 0
    %1113 = vmatpush1.bf16.msra.mxu0 0
    %1114 = vmatprep.subr.bf16.mxu0 %v634
    %1115 = vmatpush1.bf16.msra.mxu0 %v633
    %1116 = vmatprep.subr.bf16.mxu0 %v570
    %1117 = vmatpush1.bf16.msra.mxu0 %v569
    %1118 = vmatprep.subr.bf16.mxu0 0
    %1119 = vmatpush2.bf16.msra.mxu0 0
    %1120 = vmatprep.subr.bf16.mxu0 0
    %1121 = vmatpush2.bf16.msra.mxu0 0
    %1122 = vmatprep.subr.bf16.mxu0 0
    %1123 = vmatpush2.bf16.msra.mxu0 0
    %1124 = vmatprep.subr.bf16.mxu0 0
    %1125 = vmatpush2.bf16.msra.mxu0 0
    %1126 = vmatprep.subr.bf16.mxu0 0
    %1127 = vmatpush2.bf16.msra.mxu0 0
    %1128 = vmatprep.subr.bf16.mxu0 0
    %1129 = vmatpush2.bf16.msra.mxu0 0
    %1130 = vmatprep.subr.bf16.mxu0 0
    %1131 = vmatpush2.bf16.msra.mxu0 0
    %1132 = vmatprep.subr.bf16.mxu0 0
    %1133 = vmatpush2.bf16.msra.mxu0 0
    %1134 = vmatprep.mubr.bf16.mxu0 0
    %1135 = vmatmul.mubr.bf16.gmra.mxu0 %v813
    %v1136 = vpop.f32.mrf.mxu0
    %v1137 = vadd.f32 %v169, %v1136
    %v1138 = vpop.f32.mrf.mxu0
    %v1139 = vadd.f32 %v169, %v1138
    %v1140 = vpop.f32.mrf.mxu0
    %v1141 = vpop.f32.mrf.mxu0
    %1142 = vdwg.mxu0
    %1143 = vmatprep.subr.bf16.mxu0 0
    %1144 = vmatpush1.bf16.msra.mxu0 0
    %1145 = vmatprep.subr.bf16.mxu0 0
    %1146 = vmatpush1.bf16.msra.mxu0 0
    %1147 = vmatprep.subr.bf16.mxu0 0
    %1148 = vmatpush1.bf16.msra.mxu0 0
    %1149 = vmatprep.subr.bf16.mxu0 0
    %1150 = vmatpush1.bf16.msra.mxu0 0
    %1151 = vmatprep.subr.bf16.mxu0 0
    %1152 = vmatpush1.bf16.msra.mxu0 0
    %1153 = vmatprep.subr.bf16.mxu0 0
    %1154 = vmatpush1.bf16.msra.mxu0 0
    %1155 = vmatprep.subr.bf16.mxu0 %v636
    %1156 = vmatpush1.bf16.msra.mxu0 %v635
    %1157 = vmatprep.subr.bf16.mxu0 %v572
    %1158 = vmatpush1.bf16.msra.mxu0 %v571
    %1159 = vmatprep.subr.bf16.mxu0 0
    %1160 = vmatpush2.bf16.msra.mxu0 0
    %1161 = vmatprep.subr.bf16.mxu0 0
    %1162 = vmatpush2.bf16.msra.mxu0 0
    %1163 = vmatprep.subr.bf16.mxu0 0
    %1164 = vmatpush2.bf16.msra.mxu0 0
    %1165 = vmatprep.subr.bf16.mxu0 0
    %1166 = vmatpush2.bf16.msra.mxu0 0
    %1167 = vmatprep.subr.bf16.mxu0 0
    %1168 = vmatpush2.bf16.msra.mxu0 0
    %1169 = vmatprep.subr.bf16.mxu0 0
    %1170 = vmatpush2.bf16.msra.mxu0 0
    %1171 = vmatprep.subr.bf16.mxu0 0
    %1172 = vmatpush2.bf16.msra.mxu0 0
    %1173 = vmatprep.subr.bf16.mxu0 0
    %1174 = vmatpush2.bf16.msra.mxu0 0
    %1175 = vmatprep.mubr.bf16.mxu0 0
    %1176 = vmatmul.mubr.bf16.gmra.mxu0 %v813
    %v1177 = vpop.f32.mrf.mxu0
    %v1178 = vadd.f32 %v169, %v1177
    %v1179 = vpop.f32.mrf.mxu0
    %v1180 = vadd.f32 %v169, %v1179
    %v1181 = vpop.f32.mrf.mxu0
    %v1182 = vpop.f32.mrf.mxu0
    %1183 = vdwg.mxu0
    %1184 = vmatprep.subr.bf16.mxu0 0
    %1185 = vmatpush1.bf16.msra.mxu0 0
    %1186 = vmatprep.subr.bf16.mxu0 0
    %1187 = vmatpush1.bf16.msra.mxu0 0
    %1188 = vmatprep.subr.bf16.mxu0 0
    %1189 = vmatpush1.bf16.msra.mxu0 0
    %1190 = vmatprep.subr.bf16.mxu0 0
    %1191 = vmatpush1.bf16.msra.mxu0 0
    %1192 = vmatprep.subr.bf16.mxu0 0
    %1193 = vmatpush1.bf16.msra.mxu0 0
    %1194 = vmatprep.subr.bf16.mxu0 0
    %1195 = vmatpush1.bf16.msra.mxu0 0
    %1196 = vmatprep.subr.bf16.mxu0 %v638
    %1197 = vmatpush1.bf16.msra.mxu0 %v637
    %1198 = vmatprep.subr.bf16.mxu0 %v574
    %1199 = vmatpush1.bf16.msra.mxu0 %v573
    %1200 = vmatprep.subr.bf16.mxu0 0
    %1201 = vmatpush2.bf16.msra.mxu0 0
    %1202 = vmatprep.subr.bf16.mxu0 0
    %1203 = vmatpush2.bf16.msra.mxu0 0
    %1204 = vmatprep.subr.bf16.mxu0 0
    %1205 = vmatpush2.bf16.msra.mxu0 0
    %1206 = vmatprep.subr.bf16.mxu0 0
    %1207 = vmatpush2.bf16.msra.mxu0 0
    %1208 = vmatprep.subr.bf16.mxu0 0
    %1209 = vmatpush2.bf16.msra.mxu0 0
    %1210 = vmatprep.subr.bf16.mxu0 0
    %1211 = vmatpush2.bf16.msra.mxu0 0
    %1212 = vmatprep.subr.bf16.mxu0 0
    %1213 = vmatpush2.bf16.msra.mxu0 0
    %1214 = vmatprep.subr.bf16.mxu0 0
    %1215 = vmatpush2.bf16.msra.mxu0 0
    %1216 = vmatprep.mubr.bf16.mxu0 0
    %1217 = vmatmul.mubr.bf16.gmra.mxu0 %v813
    %v1218 = vpop.f32.mrf.mxu0
    %v1219 = vadd.f32 %v169, %v1218
    %v1220 = vpop.f32.mrf.mxu0
    %v1221 = vadd.f32 %v169, %v1220
    %v1222 = vpop.f32.mrf.mxu0
    %v1223 = vpop.f32.mrf.mxu0
    %1224 = vdwg.mxu0
    %1225 = vmatprep.subr.bf16.mxu0 0
    %1226 = vmatpush1.bf16.msra.mxu0 0
    %1227 = vmatprep.subr.bf16.mxu0 0
    %1228 = vmatpush1.bf16.msra.mxu0 0
    %1229 = vmatprep.subr.bf16.mxu0 0
    %1230 = vmatpush1.bf16.msra.mxu0 0
    %1231 = vmatprep.subr.bf16.mxu0 0
    %1232 = vmatpush1.bf16.msra.mxu0 0
    %1233 = vmatprep.subr.bf16.mxu0 0
    %1234 = vmatpush1.bf16.msra.mxu0 0
    %1235 = vmatprep.subr.bf16.mxu0 0
    %1236 = vmatpush1.bf16.msra.mxu0 0
    %1237 = vmatprep.subr.bf16.mxu0 %v640
    %1238 = vmatpush1.bf16.msra.mxu0 %v639
    %1239 = vmatprep.subr.bf16.mxu0 %v576
    %1240 = vmatpush1.bf16.msra.mxu0 %v575
    %1241 = vmatprep.subr.bf16.mxu0 0
    %1242 = vmatpush2.bf16.msra.mxu0 0
    %1243 = vmatprep.subr.bf16.mxu0 0
    %1244 = vmatpush2.bf16.msra.mxu0 0
    %1245 = vmatprep.subr.bf16.mxu0 0
    %1246 = vmatpush2.bf16.msra.mxu0 0
    %1247 = vmatprep.subr.bf16.mxu0 0
    %1248 = vmatpush2.bf16.msra.mxu0 0
    %1249 = vmatprep.subr.bf16.mxu0 0
    %1250 = vmatpush2.bf16.msra.mxu0 0
    %1251 = vmatprep.subr.bf16.mxu0 0
    %1252 = vmatpush2.bf16.msra.mxu0 0
    %1253 = vmatprep.subr.bf16.mxu0 0
    %1254 = vmatpush2.bf16.msra.mxu0 0
    %1255 = vmatprep.subr.bf16.mxu0 0
    %1256 = vmatpush2.bf16.msra.mxu0 0
    %1257 = vmatprep.mubr.bf16.mxu0 0
    %1258 = vmatmul.mubr.bf16.gmra.mxu0 %v813
    %v1259 = vpop.f32.mrf.mxu0
    %v1260 = vadd.f32 %v169, %v1259
    %v1261 = vpop.f32.mrf.mxu0
    %v1262 = vadd.f32 %v169, %v1261
    %v1263 = vpop.f32.mrf.mxu0
    %v1264 = vpop.f32.mrf.mxu0
    %1265 = vdwg.mxu0
    %1266 = vmatprep.subr.bf16.mxu0 0
    %1267 = vmatpush1.bf16.msra.mxu0 0
    %1268 = vmatprep.subr.bf16.mxu0 0
    %1269 = vmatpush1.bf16.msra.mxu0 0
    %1270 = vmatprep.subr.bf16.mxu0 0
    %1271 = vmatpush1.bf16.msra.mxu0 0
    %1272 = vmatprep.subr.bf16.mxu0 0
    %1273 = vmatpush1.bf16.msra.mxu0 0
    %1274 = vmatprep.subr.bf16.mxu0 0
    %1275 = vmatpush1.bf16.msra.mxu0 0
    %1276 = vmatprep.subr.bf16.mxu0 0
    %1277 = vmatpush1.bf16.msra.mxu0 0
    %1278 = vmatprep.subr.bf16.mxu0 %v642
    %1279 = vmatpush1.bf16.msra.mxu0 %v641
    %1280 = vmatprep.subr.bf16.mxu0 %v578
    %1281 = vmatpush1.bf16.msra.mxu0 %v577
    %1282 = vmatprep.subr.bf16.mxu0 0
    %1283 = vmatpush2.bf16.msra.mxu0 0
    %1284 = vmatprep.subr.bf16.mxu0 0
    %1285 = vmatpush2.bf16.msra.mxu0 0
    %1286 = vmatprep.subr.bf16.mxu0 0
    %1287 = vmatpush2.bf16.msra.mxu0 0
    %1288 = vmatprep.subr.bf16.mxu0 0
    %1289 = vmatpush2.bf16.msra.mxu0 0
    %1290 = vmatprep.subr.bf16.mxu0 0
    %1291 = vmatpush2.bf16.msra.mxu0 0
    %1292 = vmatprep.subr.bf16.mxu0 0
    %1293 = vmatpush2.bf16.msra.mxu0 0
    %1294 = vmatprep.subr.bf16.mxu0 0
    %1295 = vmatpush2.bf16.msra.mxu0 0
    %1296 = vmatprep.subr.bf16.mxu0 0
    %1297 = vmatpush2.bf16.msra.mxu0 0
    %1298 = vmatprep.mubr.bf16.mxu0 0
    %1299 = vmatmul.mubr.bf16.gmra.mxu0 %v813
    %v1300 = vpop.f32.mrf.mxu0
    %v1301 = vadd.f32 %v169, %v1300
    %v1302 = vpop.f32.mrf.mxu0
    %v1303 = vadd.f32 %v169, %v1302
    %v1304 = vpop.f32.mrf.mxu0
    %v1305 = vpop.f32.mrf.mxu0
    %1306 = vdwg.mxu0
    %1307 = vmatprep.subr.bf16.mxu0 0
    %1308 = vmatpush1.bf16.msra.mxu0 0
    %1309 = vmatprep.subr.bf16.mxu0 0
    %1310 = vmatpush1.bf16.msra.mxu0 0
    %1311 = vmatprep.subr.bf16.mxu0 0
    %1312 = vmatpush1.bf16.msra.mxu0 0
    %1313 = vmatprep.subr.bf16.mxu0 0
    %1314 = vmatpush1.bf16.msra.mxu0 0
    %1315 = vmatprep.subr.bf16.mxu0 0
    %1316 = vmatpush1.bf16.msra.mxu0 0
    %1317 = vmatprep.subr.bf16.mxu0 0
    %1318 = vmatpush1.bf16.msra.mxu0 0
    %1319 = vmatprep.subr.bf16.mxu0 %v644
    %1320 = vmatpush1.bf16.msra.mxu0 %v643
    %1321 = vmatprep.subr.bf16.mxu0 %v580
    %1322 = vmatpush1.bf16.msra.mxu0 %v579
    %1323 = vmatprep.subr.bf16.mxu0 0
    %1324 = vmatpush2.bf16.msra.mxu0 0
    %1325 = vmatprep.subr.bf16.mxu0 0
    %1326 = vmatpush2.bf16.msra.mxu0 0
    %1327 = vmatprep.subr.bf16.mxu0 0
    %1328 = vmatpush2.bf16.msra.mxu0 0
    %1329 = vmatprep.subr.bf16.mxu0 0
    %1330 = vmatpush2.bf16.msra.mxu0 0
    %1331 = vmatprep.subr.bf16.mxu0 0
    %1332 = vmatpush2.bf16.msra.mxu0 0
    %1333 = vmatprep.subr.bf16.mxu0 0
    %1334 = vmatpush2.bf16.msra.mxu0 0
    %1335 = vmatprep.subr.bf16.mxu0 0
    %1336 = vmatpush2.bf16.msra.mxu0 0
    %1337 = vmatprep.subr.bf16.mxu0 0
    %1338 = vmatpush2.bf16.msra.mxu0 0
    %1339 = vmatprep.mubr.bf16.mxu0 0
    %1340 = vmatmul.mubr.bf16.gmra.mxu0 %v813
    %v1341 = vpop.f32.mrf.mxu0
    %v1342 = vadd.f32 %v169, %v1341
    %v1343 = vpop.f32.mrf.mxu0
    %v1344 = vadd.f32 %v169, %v1343
    %v1345 = vpop.f32.mrf.mxu0
    %v1346 = vpop.f32.mrf.mxu0
    %1347 = vdwg.mxu0
    %1348 = vmatprep.subr.bf16.mxu0 0
    %1349 = vmatpush1.bf16.msra.mxu0 0
    %1350 = vmatprep.subr.bf16.mxu0 0
    %1351 = vmatpush1.bf16.msra.mxu0 0
    %1352 = vmatprep.subr.bf16.mxu0 0
    %1353 = vmatpush1.bf16.msra.mxu0 0
    %1354 = vmatprep.subr.bf16.mxu0 0
    %1355 = vmatpush1.bf16.msra.mxu0 0
    %1356 = vmatprep.subr.bf16.mxu0 0
    %1357 = vmatpush1.bf16.msra.mxu0 0
    %1358 = vmatprep.subr.bf16.mxu0 0
    %1359 = vmatpush1.bf16.msra.mxu0 0
    %1360 = vmatprep.subr.bf16.mxu0 %v646
    %1361 = vmatpush1.bf16.msra.mxu0 %v645
    %1362 = vmatprep.subr.bf16.mxu0 %v582
    %1363 = vmatpush1.bf16.msra.mxu0 %v581
    %1364 = vmatprep.subr.bf16.mxu0 0
    %1365 = vmatpush2.bf16.msra.mxu0 0
    %1366 = vmatprep.subr.bf16.mxu0 0
    %1367 = vmatpush2.bf16.msra.mxu0 0
    %1368 = vmatprep.subr.bf16.mxu0 0
    %1369 = vmatpush2.bf16.msra.mxu0 0
    %1370 = vmatprep.subr.bf16.mxu0 0
    %1371 = vmatpush2.bf16.msra.mxu0 0
    %1372 = vmatprep.subr.bf16.mxu0 0
    %1373 = vmatpush2.bf16.msra.mxu0 0
    %1374 = vmatprep.subr.bf16.mxu0 0
    %1375 = vmatpush2.bf16.msra.mxu0 0
    %1376 = vmatprep.subr.bf16.mxu0 0
    %1377 = vmatpush2.bf16.msra.mxu0 0
    %1378 = vmatprep.subr.bf16.mxu0 0
    %1379 = vmatpush2.bf16.msra.mxu0 0
    %1380 = vmatprep.mubr.bf16.mxu0 0
    %1381 = vmatmul.mubr.bf16.gmra.mxu0 %v813
    %v1382 = vpop.f32.mrf.mxu0
    %v1383 = vadd.f32 %v169, %v1382
    %v1384 = vpop.f32.mrf.mxu0
    %v1385 = vadd.f32 %v169, %v1384
    %v1386 = vpop.f32.mrf.mxu0
    %v1387 = vpop.f32.mrf.mxu0
    %1388 = vdwg.mxu0
    %1389 = vmatprep.subr.bf16.mxu0 0
    %1390 = vmatpush1.bf16.msra.mxu0 0
    %1391 = vmatprep.subr.bf16.mxu0 0
    %1392 = vmatpush1.bf16.msra.mxu0 0
    %1393 = vmatprep.subr.bf16.mxu0 0
    %1394 = vmatpush1.bf16.msra.mxu0 0
    %1395 = vmatprep.subr.bf16.mxu0 0
    %1396 = vmatpush1.bf16.msra.mxu0 0
    %1397 = vmatprep.subr.bf16.mxu0 0
    %1398 = vmatpush1.bf16.msra.mxu0 0
    %1399 = vmatprep.subr.bf16.mxu0 0
    %1400 = vmatpush1.bf16.msra.mxu0 0
    %1401 = vmatprep.subr.bf16.mxu0 %v648
    %1402 = vmatpush1.bf16.msra.mxu0 %v647
    %1403 = vmatprep.subr.bf16.mxu0 %v584
    %1404 = vmatpush1.bf16.msra.mxu0 %v583
    %1405 = vmatprep.subr.bf16.mxu0 0
    %1406 = vmatpush2.bf16.msra.mxu0 0
    %1407 = vmatprep.subr.bf16.mxu0 0
    %1408 = vmatpush2.bf16.msra.mxu0 0
    %1409 = vmatprep.subr.bf16.mxu0 0
    %1410 = vmatpush2.bf16.msra.mxu0 0
    %1411 = vmatprep.subr.bf16.mxu0 0
    %1412 = vmatpush2.bf16.msra.mxu0 0
    %1413 = vmatprep.subr.bf16.mxu0 0
    %1414 = vmatpush2.bf16.msra.mxu0 0
    %1415 = vmatprep.subr.bf16.mxu0 0
    %1416 = vmatpush2.bf16.msra.mxu0 0
    %1417 = vmatprep.subr.bf16.mxu0 0
    %1418 = vmatpush2.bf16.msra.mxu0 0
    %1419 = vmatprep.subr.bf16.mxu0 0
    %1420 = vmatpush2.bf16.msra.mxu0 0
    %1421 = vmatprep.mubr.bf16.mxu0 0
    %1422 = vmatmul.mubr.bf16.gmra.mxu0 %v813
    %v1423 = vpop.f32.mrf.mxu0
    %v1424 = vadd.f32 %v169, %v1423
    %v1425 = vpop.f32.mrf.mxu0
    %v1426 = vadd.f32 %v169, %v1425
    %v1427 = vpop.f32.mrf.mxu0
    %v1428 = vpop.f32.mrf.mxu0
    %1429 = vdwg.mxu0
    %1430 = vmatprep.subr.bf16.mxu0 0
    %1431 = vmatpush1.bf16.msra.mxu0 0
    %1432 = vmatprep.subr.bf16.mxu0 0
    %1433 = vmatpush1.bf16.msra.mxu0 0
    %1434 = vmatprep.subr.bf16.mxu0 0
    %1435 = vmatpush1.bf16.msra.mxu0 0
    %1436 = vmatprep.subr.bf16.mxu0 0
    %1437 = vmatpush1.bf16.msra.mxu0 0
    %1438 = vmatprep.subr.bf16.mxu0 0
    %1439 = vmatpush1.bf16.msra.mxu0 0
    %1440 = vmatprep.subr.bf16.mxu0 0
    %1441 = vmatpush1.bf16.msra.mxu0 0
    %1442 = vmatprep.subr.bf16.mxu0 %v650
    %1443 = vmatpush1.bf16.msra.mxu0 %v649
    %1444 = vmatprep.subr.bf16.mxu0 %v586
    %1445 = vmatpush1.bf16.msra.mxu0 %v585
    %1446 = vmatprep.subr.bf16.mxu0 0
    %1447 = vmatpush2.bf16.msra.mxu0 0
    %1448 = vmatprep.subr.bf16.mxu0 0
    %1449 = vmatpush2.bf16.msra.mxu0 0
    %1450 = vmatprep.subr.bf16.mxu0 0
    %1451 = vmatpush2.bf16.msra.mxu0 0
    %1452 = vmatprep.subr.bf16.mxu0 0
    %1453 = vmatpush2.bf16.msra.mxu0 0
    %1454 = vmatprep.subr.bf16.mxu0 0
    %1455 = vmatpush2.bf16.msra.mxu0 0
    %1456 = vmatprep.subr.bf16.mxu0 0
    %1457 = vmatpush2.bf16.msra.mxu0 0
    %1458 = vmatprep.subr.bf16.mxu0 0
    %1459 = vmatpush2.bf16.msra.mxu0 0
    %1460 = vmatprep.subr.bf16.mxu0 0
    %1461 = vmatpush2.bf16.msra.mxu0 0
    %1462 = vmatprep.mubr.bf16.mxu0 0
    %1463 = vmatmul.mubr.bf16.gmra.mxu0 %v813
    %v1464 = vpop.f32.mrf.mxu0
    %v1465 = vadd.f32 %v169, %v1464
    %v1466 = vpop.f32.mrf.mxu0
    %v1467 = vadd.f32 %v169, %v1466
    %v1468 = vpop.f32.mrf.mxu0
    %v1469 = vpop.f32.mrf.mxu0
    %1470 = vdwg.mxu0
    %1471 = vmatprep.subr.bf16.mxu0 0
    %1472 = vmatpush1.bf16.msra.mxu0 0
    %1473 = vmatprep.subr.bf16.mxu0 0
    %1474 = vmatpush1.bf16.msra.mxu0 0
    %1475 = vmatprep.subr.bf16.mxu0 0
    %1476 = vmatpush1.bf16.msra.mxu0 0
    %1477 = vmatprep.subr.bf16.mxu0 0
    %1478 = vmatpush1.bf16.msra.mxu0 0
    %1479 = vmatprep.subr.bf16.mxu0 0
    %1480 = vmatpush1.bf16.msra.mxu0 0
    %1481 = vmatprep.subr.bf16.mxu0 0
    %1482 = vmatpush1.bf16.msra.mxu0 0
    %1483 = vmatprep.subr.bf16.mxu0 %v652
    %1484 = vmatpush1.bf16.msra.mxu0 %v651
    %1485 = vmatprep.subr.bf16.mxu0 %v588
    %1486 = vmatpush1.bf16.msra.mxu0 %v587
    %1487 = vmatprep.subr.bf16.mxu0 0
    %1488 = vmatpush2.bf16.msra.mxu0 0
    %1489 = vmatprep.subr.bf16.mxu0 0
    %1490 = vmatpush2.bf16.msra.mxu0 0
    %1491 = vmatprep.subr.bf16.mxu0 0
    %1492 = vmatpush2.bf16.msra.mxu0 0
    %1493 = vmatprep.subr.bf16.mxu0 0
    %1494 = vmatpush2.bf16.msra.mxu0 0
    %1495 = vmatprep.subr.bf16.mxu0 0
    %1496 = vmatpush2.bf16.msra.mxu0 0
    %1497 = vmatprep.subr.bf16.mxu0 0
    %1498 = vmatpush2.bf16.msra.mxu0 0
    %1499 = vmatprep.subr.bf16.mxu0 0
    %1500 = vmatpush2.bf16.msra.mxu0 0
    %1501 = vmatprep.subr.bf16.mxu0 0
    %1502 = vmatpush2.bf16.msra.mxu0 0
    %1503 = vmatprep.mubr.bf16.mxu0 0
    %1504 = vmatmul.mubr.bf16.gmra.mxu0 %v813
    %v1505 = vpop.f32.mrf.mxu0
    %v1506 = vadd.f32 %v169, %v1505
    %v1507 = vpop.f32.mrf.mxu0
    %v1508 = vadd.f32 %v169, %v1507
    %v1509 = vpop.f32.mrf.mxu0
    %v1510 = vpop.f32.mrf.mxu0
    %1511 = vdwg.mxu0
    %1512 = vmatprep.subr.bf16.mxu0 0
    %1513 = vmatpush1.bf16.msra.mxu0 0
    %1514 = vmatprep.subr.bf16.mxu0 0
    %1515 = vmatpush1.bf16.msra.mxu0 0
    %1516 = vmatprep.subr.bf16.mxu0 0
    %1517 = vmatpush1.bf16.msra.mxu0 0
    %1518 = vmatprep.subr.bf16.mxu0 0
    %1519 = vmatpush1.bf16.msra.mxu0 0
    %1520 = vmatprep.subr.bf16.mxu0 0
    %1521 = vmatpush1.bf16.msra.mxu0 0
    %1522 = vmatprep.subr.bf16.mxu0 0
    %1523 = vmatpush1.bf16.msra.mxu0 0
    %1524 = vmatprep.subr.bf16.mxu0 %v654
    %1525 = vmatpush1.bf16.msra.mxu0 %v653
    %1526 = vmatprep.subr.bf16.mxu0 %v590
    %1527 = vmatpush1.bf16.msra.mxu0 %v589
    %1528 = vmatprep.subr.bf16.mxu0 0
    %1529 = vmatpush2.bf16.msra.mxu0 0
    %1530 = vmatprep.subr.bf16.mxu0 0
    %1531 = vmatpush2.bf16.msra.mxu0 0
    %1532 = vmatprep.subr.bf16.mxu0 0
    %1533 = vmatpush2.bf16.msra.mxu0 0
    %1534 = vmatprep.subr.bf16.mxu0 0
    %1535 = vmatpush2.bf16.msra.mxu0 0
    %1536 = vmatprep.subr.bf16.mxu0 0
    %1537 = vmatpush2.bf16.msra.mxu0 0
    %1538 = vmatprep.subr.bf16.mxu0 0
    %1539 = vmatpush2.bf16.msra.mxu0 0
    %1540 = vmatprep.subr.bf16.mxu0 0
    %1541 = vmatpush2.bf16.msra.mxu0 0
    %1542 = vmatprep.subr.bf16.mxu0 0
    %1543 = vmatpush2.bf16.msra.mxu0 0
    %1544 = vmatprep.mubr.bf16.mxu0 0
    %1545 = vmatmul.mubr.bf16.gmra.mxu0 %v813
    %v1546 = vpop.f32.mrf.mxu0
    %v1547 = vadd.f32 %v169, %v1546
    %v1548 = vpop.f32.mrf.mxu0
    %v1549 = vadd.f32 %v169, %v1548
    %v1550 = vpop.f32.mrf.mxu0
    %v1551 = vpop.f32.mrf.mxu0
    %1552 = vdwg.mxu0
    %1553 = vmatprep.subr.bf16.mxu0 0
    %1554 = vmatpush1.bf16.msra.mxu0 0
    %1555 = vmatprep.subr.bf16.mxu0 0
    %1556 = vmatpush1.bf16.msra.mxu0 0
    %1557 = vmatprep.subr.bf16.mxu0 0
    %1558 = vmatpush1.bf16.msra.mxu0 0
    %1559 = vmatprep.subr.bf16.mxu0 0
    %1560 = vmatpush1.bf16.msra.mxu0 0
    %1561 = vmatprep.subr.bf16.mxu0 0
    %1562 = vmatpush1.bf16.msra.mxu0 0
    %1563 = vmatprep.subr.bf16.mxu0 0
    %1564 = vmatpush1.bf16.msra.mxu0 0
    %1565 = vmatprep.subr.bf16.mxu0 %v656
    %1566 = vmatpush1.bf16.msra.mxu0 %v655
    %1567 = vmatprep.subr.bf16.mxu0 %v592
    %1568 = vmatpush1.bf16.msra.mxu0 %v591
    %1569 = vmatprep.subr.bf16.mxu0 0
    %1570 = vmatpush2.bf16.msra.mxu0 0
    %1571 = vmatprep.subr.bf16.mxu0 0
    %1572 = vmatpush2.bf16.msra.mxu0 0
    %1573 = vmatprep.subr.bf16.mxu0 0
    %1574 = vmatpush2.bf16.msra.mxu0 0
    %1575 = vmatprep.subr.bf16.mxu0 0
    %1576 = vmatpush2.bf16.msra.mxu0 0
    %1577 = vmatprep.subr.bf16.mxu0 0
    %1578 = vmatpush2.bf16.msra.mxu0 0
    %1579 = vmatprep.subr.bf16.mxu0 0
    %1580 = vmatpush2.bf16.msra.mxu0 0
    %1581 = vmatprep.subr.bf16.mxu0 0
    %1582 = vmatpush2.bf16.msra.mxu0 0
    %1583 = vmatprep.subr.bf16.mxu0 0
    %1584 = vmatpush2.bf16.msra.mxu0 0
    %1585 = vmatprep.mubr.bf16.mxu0 0
    %1586 = vmatmul.mubr.bf16.gmra.mxu0 %v813
    %v1587 = vpop.f32.mrf.mxu0
    %v1588 = vadd.f32 %v169, %v1587
    %v1589 = vpop.f32.mrf.mxu0
    %v1590 = vadd.f32 %v169, %v1589
    %v1591 = vpop.f32.mrf.mxu0
    %v1592 = vpop.f32.mrf.mxu0
    %1593 = vdwg.mxu0
    %1594 = vmatprep.subr.bf16.mxu0 0
    %1595 = vmatpush1.bf16.msra.mxu0 0
    %1596 = vmatprep.subr.bf16.mxu0 0
    %1597 = vmatpush1.bf16.msra.mxu0 0
    %1598 = vmatprep.subr.bf16.mxu0 0
    %1599 = vmatpush1.bf16.msra.mxu0 0
    %1600 = vmatprep.subr.bf16.mxu0 0
    %1601 = vmatpush1.bf16.msra.mxu0 0
    %1602 = vmatprep.subr.bf16.mxu0 0
    %1603 = vmatpush1.bf16.msra.mxu0 0
    %1604 = vmatprep.subr.bf16.mxu0 0
    %1605 = vmatpush1.bf16.msra.mxu0 0
    %1606 = vmatprep.subr.bf16.mxu0 %v658
    %1607 = vmatpush1.bf16.msra.mxu0 %v657
    %1608 = vmatprep.subr.bf16.mxu0 %v594
    %1609 = vmatpush1.bf16.msra.mxu0 %v593
    %1610 = vmatprep.subr.bf16.mxu0 0
    %1611 = vmatpush2.bf16.msra.mxu0 0
    %1612 = vmatprep.subr.bf16.mxu0 0
    %1613 = vmatpush2.bf16.msra.mxu0 0
    %1614 = vmatprep.subr.bf16.mxu0 0
    %1615 = vmatpush2.bf16.msra.mxu0 0
    %1616 = vmatprep.subr.bf16.mxu0 0
    %1617 = vmatpush2.bf16.msra.mxu0 0
    %1618 = vmatprep.subr.bf16.mxu0 0
    %1619 = vmatpush2.bf16.msra.mxu0 0
    %1620 = vmatprep.subr.bf16.mxu0 0
    %1621 = vmatpush2.bf16.msra.mxu0 0
    %1622 = vmatprep.subr.bf16.mxu0 0
    %1623 = vmatpush2.bf16.msra.mxu0 0
    %1624 = vmatprep.subr.bf16.mxu0 0
    %1625 = vmatpush2.bf16.msra.mxu0 0
    %1626 = vmatprep.mubr.bf16.mxu0 0
    %1627 = vmatmul.mubr.bf16.gmra.mxu0 %v813
    %v1628 = vpop.f32.mrf.mxu0
    %v1629 = vadd.f32 %v169, %v1628
    %v1630 = vpop.f32.mrf.mxu0
    %v1631 = vadd.f32 %v169, %v1630
    %v1632 = vpop.f32.mrf.mxu0
    %v1633 = vpop.f32.mrf.mxu0
    %1634 = vdwg.mxu0
    %1635 = vmatprep.subr.bf16.mxu0 0
    %1636 = vmatpush1.bf16.msra.mxu0 0
    %1637 = vmatprep.subr.bf16.mxu0 0
    %1638 = vmatpush1.bf16.msra.mxu0 0
    %1639 = vmatprep.subr.bf16.mxu0 0
    %1640 = vmatpush1.bf16.msra.mxu0 0
    %1641 = vmatprep.subr.bf16.mxu0 0
    %1642 = vmatpush1.bf16.msra.mxu0 0
    %1643 = vmatprep.subr.bf16.mxu0 0
    %1644 = vmatpush1.bf16.msra.mxu0 0
    %1645 = vmatprep.subr.bf16.mxu0 0
    %1646 = vmatpush1.bf16.msra.mxu0 0
    %1647 = vmatprep.subr.bf16.mxu0 %v660
    %1648 = vmatpush1.bf16.msra.mxu0 %v659
    %1649 = vmatprep.subr.bf16.mxu0 %v596
    %1650 = vmatpush1.bf16.msra.mxu0 %v595
    %1651 = vmatprep.subr.bf16.mxu0 0
    %1652 = vmatpush2.bf16.msra.mxu0 0
    %1653 = vmatprep.subr.bf16.mxu0 0
    %1654 = vmatpush2.bf16.msra.mxu0 0
    %1655 = vmatprep.subr.bf16.mxu0 0
    %1656 = vmatpush2.bf16.msra.mxu0 0
    %1657 = vmatprep.subr.bf16.mxu0 0
    %1658 = vmatpush2.bf16.msra.mxu0 0
    %1659 = vmatprep.subr.bf16.mxu0 0
    %1660 = vmatpush2.bf16.msra.mxu0 0
    %1661 = vmatprep.subr.bf16.mxu0 0
    %1662 = vmatpush2.bf16.msra.mxu0 0
    %1663 = vmatprep.subr.bf16.mxu0 0
    %1664 = vmatpush2.bf16.msra.mxu0 0
    %1665 = vmatprep.subr.bf16.mxu0 0
    %1666 = vmatpush2.bf16.msra.mxu0 0
    %1667 = vmatprep.mubr.bf16.mxu0 0
    %1668 = vmatmul.mubr.bf16.gmra.mxu0 %v813
    %v1669 = vpop.f32.mrf.mxu0
    %v1670 = vadd.f32 %v169, %v1669
    %v1671 = vpop.f32.mrf.mxu0
    %v1672 = vadd.f32 %v169, %v1671
    %v1673 = vpop.f32.mrf.mxu0
    %v1674 = vpop.f32.mrf.mxu0
    %1675 = vdwg.mxu0
    %1676 = vmatprep.subr.bf16.mxu0 0
    %1677 = vmatpush1.bf16.msra.mxu0 0
    %1678 = vmatprep.subr.bf16.mxu0 0
    %1679 = vmatpush1.bf16.msra.mxu0 0
    %1680 = vmatprep.subr.bf16.mxu0 0
    %1681 = vmatpush1.bf16.msra.mxu0 0
    %1682 = vmatprep.subr.bf16.mxu0 0
    %1683 = vmatpush1.bf16.msra.mxu0 0
    %1684 = vmatprep.subr.bf16.mxu0 0
    %1685 = vmatpush1.bf16.msra.mxu0 0
    %1686 = vmatprep.subr.bf16.mxu0 0
    %1687 = vmatpush1.bf16.msra.mxu0 0
    %1688 = vmatprep.subr.bf16.mxu0 %v662
    %1689 = vmatpush1.bf16.msra.mxu0 %v661
    %1690 = vmatprep.subr.bf16.mxu0 %v598
    %1691 = vmatpush1.bf16.msra.mxu0 %v597
    %1692 = vmatprep.subr.bf16.mxu0 0
    %1693 = vmatpush2.bf16.msra.mxu0 0
    %1694 = vmatprep.subr.bf16.mxu0 0
    %1695 = vmatpush2.bf16.msra.mxu0 0
    %1696 = vmatprep.subr.bf16.mxu0 0
    %1697 = vmatpush2.bf16.msra.mxu0 0
    %1698 = vmatprep.subr.bf16.mxu0 0
    %1699 = vmatpush2.bf16.msra.mxu0 0
    %1700 = vmatprep.subr.bf16.mxu0 0
    %1701 = vmatpush2.bf16.msra.mxu0 0
    %1702 = vmatprep.subr.bf16.mxu0 0
    %1703 = vmatpush2.bf16.msra.mxu0 0
    %1704 = vmatprep.subr.bf16.mxu0 0
    %1705 = vmatpush2.bf16.msra.mxu0 0
    %1706 = vmatprep.subr.bf16.mxu0 0
    %1707 = vmatpush2.bf16.msra.mxu0 0
    %1708 = vmatprep.mubr.bf16.mxu0 0
    %1709 = vmatmul.mubr.bf16.gmra.mxu0 %v813
    %v1710 = vpop.f32.mrf.mxu0
    %v1711 = vadd.f32 %v169, %v1710
    %v1712 = vpop.f32.mrf.mxu0
    %v1713 = vadd.f32 %v169, %v1712
    %v1714 = vpop.f32.mrf.mxu0
    %v1715 = vpop.f32.mrf.mxu0
    %1716 = vdwg.mxu0
    %1717 = vmatprep.subr.bf16.mxu0 0
    %1718 = vmatpush1.bf16.msra.mxu0 0
    %1719 = vmatprep.subr.bf16.mxu0 0
    %1720 = vmatpush1.bf16.msra.mxu0 0
    %1721 = vmatprep.subr.bf16.mxu0 0
    %1722 = vmatpush1.bf16.msra.mxu0 0
    %1723 = vmatprep.subr.bf16.mxu0 0
    %1724 = vmatpush1.bf16.msra.mxu0 0
    %1725 = vmatprep.subr.bf16.mxu0 0
    %1726 = vmatpush1.bf16.msra.mxu0 0
    %1727 = vmatprep.subr.bf16.mxu0 0
    %1728 = vmatpush1.bf16.msra.mxu0 0
    %1729 = vmatprep.subr.bf16.mxu0 %v664
    %1730 = vmatpush1.bf16.msra.mxu0 %v663
    %1731 = vmatprep.subr.bf16.mxu0 %v600
    %1732 = vmatpush1.bf16.msra.mxu0 %v599
    %1733 = vmatprep.subr.bf16.mxu0 0
    %1734 = vmatpush2.bf16.msra.mxu0 0
    %1735 = vmatprep.subr.bf16.mxu0 0
    %1736 = vmatpush2.bf16.msra.mxu0 0
    %1737 = vmatprep.subr.bf16.mxu0 0
    %1738 = vmatpush2.bf16.msra.mxu0 0
    %1739 = vmatprep.subr.bf16.mxu0 0
    %1740 = vmatpush2.bf16.msra.mxu0 0
    %1741 = vmatprep.subr.bf16.mxu0 0
    %1742 = vmatpush2.bf16.msra.mxu0 0
    %1743 = vmatprep.subr.bf16.mxu0 0
    %1744 = vmatpush2.bf16.msra.mxu0 0
    %1745 = vmatprep.subr.bf16.mxu0 0
    %1746 = vmatpush2.bf16.msra.mxu0 0
    %1747 = vmatprep.subr.bf16.mxu0 0
    %1748 = vmatpush2.bf16.msra.mxu0 0
    %1749 = vmatprep.mubr.bf16.mxu0 0
    %1750 = vmatmul.mubr.bf16.gmra.mxu0 %v813
    %v1751 = vpop.f32.mrf.mxu0
    %v1752 = vadd.f32 %v169, %v1751
    %v1753 = vpop.f32.mrf.mxu0
    %v1754 = vadd.f32 %v169, %v1753
    %v1755 = vpop.f32.mrf.mxu0
    %v1756 = vpop.f32.mrf.mxu0
    %1757 = vdwg.mxu0
    %1758 = vmatprep.subr.bf16.mxu0 0
    %1759 = vmatpush1.bf16.msra.mxu0 0
    %1760 = vmatprep.subr.bf16.mxu0 0
    %1761 = vmatpush1.bf16.msra.mxu0 0
    %1762 = vmatprep.subr.bf16.mxu0 0
    %1763 = vmatpush1.bf16.msra.mxu0 0
    %1764 = vmatprep.subr.bf16.mxu0 0
    %1765 = vmatpush1.bf16.msra.mxu0 0
    %1766 = vmatprep.subr.bf16.mxu0 0
    %1767 = vmatpush1.bf16.msra.mxu0 0
    %1768 = vmatprep.subr.bf16.mxu0 0
    %1769 = vmatpush1.bf16.msra.mxu0 0
    %1770 = vmatprep.subr.bf16.mxu0 %v666
    %1771 = vmatpush1.bf16.msra.mxu0 %v665
    %1772 = vmatprep.subr.bf16.mxu0 %v602
    %1773 = vmatpush1.bf16.msra.mxu0 %v601
    %1774 = vmatprep.subr.bf16.mxu0 0
    %1775 = vmatpush2.bf16.msra.mxu0 0
    %1776 = vmatprep.subr.bf16.mxu0 0
    %1777 = vmatpush2.bf16.msra.mxu0 0
    %1778 = vmatprep.subr.bf16.mxu0 0
    %1779 = vmatpush2.bf16.msra.mxu0 0
    %1780 = vmatprep.subr.bf16.mxu0 0
    %1781 = vmatpush2.bf16.msra.mxu0 0
    %1782 = vmatprep.subr.bf16.mxu0 0
    %1783 = vmatpush2.bf16.msra.mxu0 0
    %1784 = vmatprep.subr.bf16.mxu0 0
    %1785 = vmatpush2.bf16.msra.mxu0 0
    %1786 = vmatprep.subr.bf16.mxu0 0
    %1787 = vmatpush2.bf16.msra.mxu0 0
    %1788 = vmatprep.subr.bf16.mxu0 0
    %1789 = vmatpush2.bf16.msra.mxu0 0
    %1790 = vmatprep.mubr.bf16.mxu0 0
    %1791 = vmatmul.mubr.bf16.gmra.mxu0 %v813
    %v1792 = vpop.f32.mrf.mxu0
    %v1793 = vadd.f32 %v169, %v1792
    %v1794 = vpop.f32.mrf.mxu0
    %v1795 = vadd.f32 %v169, %v1794
    %v1796 = vpop.f32.mrf.mxu0
    %v1797 = vpop.f32.mrf.mxu0
    %1798 = vdwg.mxu0
    %1799 = vmatprep.subr.bf16.mxu0 0
    %1800 = vmatpush1.bf16.msra.mxu0 0
    %1801 = vmatprep.subr.bf16.mxu0 0
    %1802 = vmatpush1.bf16.msra.mxu0 0
    %1803 = vmatprep.subr.bf16.mxu0 0
    %1804 = vmatpush1.bf16.msra.mxu0 0
    %1805 = vmatprep.subr.bf16.mxu0 0
    %1806 = vmatpush1.bf16.msra.mxu0 0
    %1807 = vmatprep.subr.bf16.mxu0 0
    %1808 = vmatpush1.bf16.msra.mxu0 0
    %1809 = vmatprep.subr.bf16.mxu0 0
    %1810 = vmatpush1.bf16.msra.mxu0 0
    %1811 = vmatprep.subr.bf16.mxu0 %v668
    %1812 = vmatpush1.bf16.msra.mxu0 %v667
    %1813 = vmatprep.subr.bf16.mxu0 %v604
    %1814 = vmatpush1.bf16.msra.mxu0 %v603
    %1815 = vmatprep.subr.bf16.mxu0 0
    %1816 = vmatpush2.bf16.msra.mxu0 0
    %1817 = vmatprep.subr.bf16.mxu0 0
    %1818 = vmatpush2.bf16.msra.mxu0 0
    %1819 = vmatprep.subr.bf16.mxu0 0
    %1820 = vmatpush2.bf16.msra.mxu0 0
    %1821 = vmatprep.subr.bf16.mxu0 0
    %1822 = vmatpush2.bf16.msra.mxu0 0
    %1823 = vmatprep.subr.bf16.mxu0 0
    %1824 = vmatpush2.bf16.msra.mxu0 0
    %1825 = vmatprep.subr.bf16.mxu0 0
    %1826 = vmatpush2.bf16.msra.mxu0 0
    %1827 = vmatprep.subr.bf16.mxu0 0
    %1828 = vmatpush2.bf16.msra.mxu0 0
    %1829 = vmatprep.subr.bf16.mxu0 0
    %1830 = vmatpush2.bf16.msra.mxu0 0
    %1831 = vmatprep.mubr.bf16.mxu0 0
    %1832 = vmatmul.mubr.bf16.gmra.mxu0 %v813
    %v1833 = vpop.f32.mrf.mxu0
    %v1834 = vadd.f32 %v169, %v1833
    %v1835 = vpop.f32.mrf.mxu0
    %v1836 = vadd.f32 %v169, %v1835
    %v1837 = vpop.f32.mrf.mxu0
    %v1838 = vpop.f32.mrf.mxu0
    %1839 = vdwg.mxu0
    %1840 = vmatprep.subr.bf16.mxu0 0
    %1841 = vmatpush1.bf16.msra.mxu0 0
    %1842 = vmatprep.subr.bf16.mxu0 0
    %1843 = vmatpush1.bf16.msra.mxu0 0
    %1844 = vmatprep.subr.bf16.mxu0 0
    %1845 = vmatpush1.bf16.msra.mxu0 0
    %1846 = vmatprep.subr.bf16.mxu0 0
    %1847 = vmatpush1.bf16.msra.mxu0 0
    %1848 = vmatprep.subr.bf16.mxu0 0
    %1849 = vmatpush1.bf16.msra.mxu0 0
    %1850 = vmatprep.subr.bf16.mxu0 0
    %1851 = vmatpush1.bf16.msra.mxu0 0
    %1852 = vmatprep.subr.bf16.mxu0 %v670
    %1853 = vmatpush1.bf16.msra.mxu0 %v669
    %1854 = vmatprep.subr.bf16.mxu0 %v606
    %1855 = vmatpush1.bf16.msra.mxu0 %v605
    %1856 = vmatprep.subr.bf16.mxu0 0
    %1857 = vmatpush2.bf16.msra.mxu0 0
    %1858 = vmatprep.subr.bf16.mxu0 0
    %1859 = vmatpush2.bf16.msra.mxu0 0
    %1860 = vmatprep.subr.bf16.mxu0 0
    %1861 = vmatpush2.bf16.msra.mxu0 0
    %1862 = vmatprep.subr.bf16.mxu0 0
    %1863 = vmatpush2.bf16.msra.mxu0 0
    %1864 = vmatprep.subr.bf16.mxu0 0
    %1865 = vmatpush2.bf16.msra.mxu0 0
    %1866 = vmatprep.subr.bf16.mxu0 0
    %1867 = vmatpush2.bf16.msra.mxu0 0
    %1868 = vmatprep.subr.bf16.mxu0 0
    %1869 = vmatpush2.bf16.msra.mxu0 0
    %1870 = vmatprep.subr.bf16.mxu0 0
    %1871 = vmatpush2.bf16.msra.mxu0 0
    %1872 = vmatprep.mubr.bf16.mxu0 0
    %1873 = vmatmul.mubr.bf16.gmra.mxu0 %v813
    %v1874 = vpop.f32.mrf.mxu0
    %v1875 = vadd.f32 %v169, %v1874
    %v1876 = vpop.f32.mrf.mxu0
    %v1877 = vadd.f32 %v169, %v1876
    %v1878 = vpop.f32.mrf.mxu0
    %v1879 = vpop.f32.mrf.mxu0
    %1880 = vdwg.mxu0
    %1881 = vmatprep.subr.bf16.mxu0 0
    %1882 = vmatpush1.bf16.msra.mxu0 0
    %1883 = vmatprep.subr.bf16.mxu0 0
    %1884 = vmatpush1.bf16.msra.mxu0 0
    %1885 = vmatprep.subr.bf16.mxu0 0
    %1886 = vmatpush1.bf16.msra.mxu0 0
    %1887 = vmatprep.subr.bf16.mxu0 0
    %1888 = vmatpush1.bf16.msra.mxu0 0
    %1889 = vmatprep.subr.bf16.mxu0 0
    %1890 = vmatpush1.bf16.msra.mxu0 0
    %1891 = vmatprep.subr.bf16.mxu0 0
    %1892 = vmatpush1.bf16.msra.mxu0 0
    %1893 = vmatprep.subr.bf16.mxu0 %v672
    %1894 = vmatpush1.bf16.msra.mxu0 %v671
    %1895 = vmatprep.subr.bf16.mxu0 %v608
    %1896 = vmatpush1.bf16.msra.mxu0 %v607
    %1897 = vmatprep.subr.bf16.mxu0 0
    %1898 = vmatpush2.bf16.msra.mxu0 0
    %1899 = vmatprep.subr.bf16.mxu0 0
    %1900 = vmatpush2.bf16.msra.mxu0 0
    %1901 = vmatprep.subr.bf16.mxu0 0
    %1902 = vmatpush2.bf16.msra.mxu0 0
    %1903 = vmatprep.subr.bf16.mxu0 0
    %1904 = vmatpush2.bf16.msra.mxu0 0
    %1905 = vmatprep.subr.bf16.mxu0 0
    %1906 = vmatpush2.bf16.msra.mxu0 0
    %1907 = vmatprep.subr.bf16.mxu0 0
    %1908 = vmatpush2.bf16.msra.mxu0 0
    %1909 = vmatprep.subr.bf16.mxu0 0
    %1910 = vmatpush2.bf16.msra.mxu0 0
    %1911 = vmatprep.subr.bf16.mxu0 0
    %1912 = vmatpush2.bf16.msra.mxu0 0
    %1913 = vmatprep.mubr.bf16.mxu0 0
    %1914 = vmatmul.mubr.bf16.gmra.mxu0 %v813
    %v1915 = vpop.f32.mrf.mxu0
    %v1916 = vadd.f32 %v169, %v1915
    %v1917 = vpop.f32.mrf.mxu0
    %v1918 = vadd.f32 %v169, %v1917
    %v1919 = vpop.f32.mrf.mxu0
    %v1920 = vpop.f32.mrf.mxu0
    %1921 = vdwg.mxu0
    %1922 = vmatprep.subr.bf16.mxu0 0
    %1923 = vmatpush1.bf16.msra.mxu0 0
    %1924 = vmatprep.subr.bf16.mxu0 0
    %1925 = vmatpush1.bf16.msra.mxu0 0
    %1926 = vmatprep.subr.bf16.mxu0 0
    %1927 = vmatpush1.bf16.msra.mxu0 0
    %1928 = vmatprep.subr.bf16.mxu0 0
    %1929 = vmatpush1.bf16.msra.mxu0 0
    %1930 = vmatprep.subr.bf16.mxu0 0
    %1931 = vmatpush1.bf16.msra.mxu0 0
    %1932 = vmatprep.subr.bf16.mxu0 0
    %1933 = vmatpush1.bf16.msra.mxu0 0
    %1934 = vmatprep.subr.bf16.mxu0 %v674
    %1935 = vmatpush1.bf16.msra.mxu0 %v673
    %1936 = vmatprep.subr.bf16.mxu0 %v610
    %1937 = vmatpush1.bf16.msra.mxu0 %v609
    %1938 = vmatprep.subr.bf16.mxu0 0
    %1939 = vmatpush2.bf16.msra.mxu0 0
    %1940 = vmatprep.subr.bf16.mxu0 0
    %1941 = vmatpush2.bf16.msra.mxu0 0
    %1942 = vmatprep.subr.bf16.mxu0 0
    %1943 = vmatpush2.bf16.msra.mxu0 0
    %1944 = vmatprep.subr.bf16.mxu0 0
    %1945 = vmatpush2.bf16.msra.mxu0 0
    %1946 = vmatprep.subr.bf16.mxu0 0
    %1947 = vmatpush2.bf16.msra.mxu0 0
    %1948 = vmatprep.subr.bf16.mxu0 0
    %1949 = vmatpush2.bf16.msra.mxu0 0
    %1950 = vmatprep.subr.bf16.mxu0 0
    %1951 = vmatpush2.bf16.msra.mxu0 0
    %1952 = vmatprep.subr.bf16.mxu0 0
    %1953 = vmatpush2.bf16.msra.mxu0 0
    %1954 = vmatprep.mubr.bf16.mxu0 0
    %1955 = vmatmul.mubr.bf16.gmra.mxu0 %v813
    %v1956 = vpop.f32.mrf.mxu0
    %v1957 = vadd.f32 %v169, %v1956
    %v1958 = vpop.f32.mrf.mxu0
    %v1959 = vadd.f32 %v169, %v1958
    %v1960 = vpop.f32.mrf.mxu0
    %v1961 = vpop.f32.mrf.mxu0
    %1962 = vdwg.mxu0
    %1963 = vmatprep.subr.bf16.mxu0 0
    %1964 = vmatpush1.bf16.msra.mxu0 0
    %1965 = vmatprep.subr.bf16.mxu0 0
    %1966 = vmatpush1.bf16.msra.mxu0 0
    %1967 = vmatprep.subr.bf16.mxu0 0
    %1968 = vmatpush1.bf16.msra.mxu0 0
    %1969 = vmatprep.subr.bf16.mxu0 0
    %1970 = vmatpush1.bf16.msra.mxu0 0
    %1971 = vmatprep.subr.bf16.mxu0 0
    %1972 = vmatpush1.bf16.msra.mxu0 0
    %1973 = vmatprep.subr.bf16.mxu0 0
    %1974 = vmatpush1.bf16.msra.mxu0 0
    %1975 = vmatprep.subr.bf16.mxu0 %v676
    %1976 = vmatpush1.bf16.msra.mxu0 %v675
    %1977 = vmatprep.subr.bf16.mxu0 %v612
    %1978 = vmatpush1.bf16.msra.mxu0 %v611
    %1979 = vmatprep.subr.bf16.mxu0 0
    %1980 = vmatpush2.bf16.msra.mxu0 0
    %1981 = vmatprep.subr.bf16.mxu0 0
    %1982 = vmatpush2.bf16.msra.mxu0 0
    %1983 = vmatprep.subr.bf16.mxu0 0
    %1984 = vmatpush2.bf16.msra.mxu0 0
    %1985 = vmatprep.subr.bf16.mxu0 0
    %1986 = vmatpush2.bf16.msra.mxu0 0
    %1987 = vmatprep.subr.bf16.mxu0 0
    %1988 = vmatpush2.bf16.msra.mxu0 0
    %1989 = vmatprep.subr.bf16.mxu0 0
    %1990 = vmatpush2.bf16.msra.mxu0 0
    %1991 = vmatprep.subr.bf16.mxu0 0
    %1992 = vmatpush2.bf16.msra.mxu0 0
    %1993 = vmatprep.subr.bf16.mxu0 0
    %1994 = vmatpush2.bf16.msra.mxu0 0
    %1995 = vmatprep.mubr.bf16.mxu0 0
    %1996 = vmatmul.mubr.bf16.gmra.mxu0 %v813
    %v1997 = vpop.f32.mrf.mxu0
    %v1998 = vadd.f32 %v169, %v1997
    %v1999 = vpop.f32.mrf.mxu0
    %v2000 = vadd.f32 %v169, %v1999
    %v2001 = vpop.f32.mrf.mxu0
    %v2002 = vpop.f32.mrf.mxu0
    %2003 = vdwg.mxu0
    %2004 = vmatprep.subr.bf16.mxu0 0
    %2005 = vmatpush1.bf16.msra.mxu0 0
    %2006 = vmatprep.subr.bf16.mxu0 0
    %2007 = vmatpush1.bf16.msra.mxu0 0
    %2008 = vmatprep.subr.bf16.mxu0 0
    %2009 = vmatpush1.bf16.msra.mxu0 0
    %2010 = vmatprep.subr.bf16.mxu0 0
    %2011 = vmatpush1.bf16.msra.mxu0 0
    %2012 = vmatprep.subr.bf16.mxu0 0
    %2013 = vmatpush1.bf16.msra.mxu0 0
    %2014 = vmatprep.subr.bf16.mxu0 0
    %2015 = vmatpush1.bf16.msra.mxu0 0
    %2016 = vmatprep.subr.bf16.mxu0 %v678
    %2017 = vmatpush1.bf16.msra.mxu0 %v677
    %2018 = vmatprep.subr.bf16.mxu0 %v614
    %2019 = vmatpush1.bf16.msra.mxu0 %v613
    %2020 = vmatprep.subr.bf16.mxu0 0
    %2021 = vmatpush2.bf16.msra.mxu0 0
    %2022 = vmatprep.subr.bf16.mxu0 0
    %2023 = vmatpush2.bf16.msra.mxu0 0
    %2024 = vmatprep.subr.bf16.mxu0 0
    %2025 = vmatpush2.bf16.msra.mxu0 0
    %2026 = vmatprep.subr.bf16.mxu0 0
    %2027 = vmatpush2.bf16.msra.mxu0 0
    %2028 = vmatprep.subr.bf16.mxu0 0
    %2029 = vmatpush2.bf16.msra.mxu0 0
    %2030 = vmatprep.subr.bf16.mxu0 0
    %2031 = vmatpush2.bf16.msra.mxu0 0
    %2032 = vmatprep.subr.bf16.mxu0 0
    %2033 = vmatpush2.bf16.msra.mxu0 0
    %2034 = vmatprep.subr.bf16.mxu0 0
    %2035 = vmatpush2.bf16.msra.mxu0 0
    %2036 = vmatprep.mubr.bf16.mxu0 0
    %2037 = vmatmul.mubr.bf16.gmra.mxu0 %v813
    %v2038 = vpop.f32.mrf.mxu0
    %v2039 = vadd.f32 %v169, %v2038
    %v2040 = vpop.f32.mrf.mxu0
    %v2041 = vadd.f32 %v169, %v2040
    %v2042 = vpop.f32.mrf.mxu0
    %v2043 = vpop.f32.mrf.mxu0
    %2044 = vdwg.mxu0
    %2045 = vmatprep.subr.bf16.mxu0 0
    %2046 = vmatpush1.bf16.msra.mxu0 0
    %2047 = vmatprep.subr.bf16.mxu0 0
    %2048 = vmatpush1.bf16.msra.mxu0 0
    %2049 = vmatprep.subr.bf16.mxu0 0
    %2050 = vmatpush1.bf16.msra.mxu0 0
    %2051 = vmatprep.subr.bf16.mxu0 0
    %2052 = vmatpush1.bf16.msra.mxu0 0
    %2053 = vmatprep.subr.bf16.mxu0 0
    %2054 = vmatpush1.bf16.msra.mxu0 0
    %2055 = vmatprep.subr.bf16.mxu0 0
    %2056 = vmatpush1.bf16.msra.mxu0 0
    %2057 = vmatprep.subr.bf16.mxu0 %v680
    %2058 = vmatpush1.bf16.msra.mxu0 %v679
    %2059 = vmatprep.subr.bf16.mxu0 %v616
    %2060 = vmatpush1.bf16.msra.mxu0 %v615
    %2061 = vmatprep.subr.bf16.mxu0 0
    %2062 = vmatpush2.bf16.msra.mxu0 0
    %2063 = vmatprep.subr.bf16.mxu0 0
    %2064 = vmatpush2.bf16.msra.mxu0 0
    %2065 = vmatprep.subr.bf16.mxu0 0
    %2066 = vmatpush2.bf16.msra.mxu0 0
    %2067 = vmatprep.subr.bf16.mxu0 0
    %2068 = vmatpush2.bf16.msra.mxu0 0
    %2069 = vmatprep.subr.bf16.mxu0 0
    %2070 = vmatpush2.bf16.msra.mxu0 0
    %2071 = vmatprep.subr.bf16.mxu0 0
    %2072 = vmatpush2.bf16.msra.mxu0 0
    %2073 = vmatprep.subr.bf16.mxu0 0
    %2074 = vmatpush2.bf16.msra.mxu0 0
    %2075 = vmatprep.subr.bf16.mxu0 0
    %2076 = vmatpush2.bf16.msra.mxu0 0
    %2077 = vmatprep.mubr.bf16.mxu0 0
    %2078 = vmatmul.mubr.bf16.gmra.mxu0 %v813
    %v2079 = vpop.f32.mrf.mxu0
    %v2080 = vadd.f32 %v169, %v2079
    %v2081 = vpop.f32.mrf.mxu0
    %v2082 = vadd.f32 %v169, %v2081
    %v2083 = vpop.f32.mrf.mxu0
    %v2084 = vpop.f32.mrf.mxu0
    %2085 = vdwg.mxu0
    %2086 = vmatprep.subr.bf16.mxu0 0
    %2087 = vmatpush1.bf16.msra.mxu0 0
    %2088 = vmatprep.subr.bf16.mxu0 0
    %2089 = vmatpush1.bf16.msra.mxu0 0
    %2090 = vmatprep.subr.bf16.mxu0 0
    %2091 = vmatpush1.bf16.msra.mxu0 0
    %2092 = vmatprep.subr.bf16.mxu0 0
    %2093 = vmatpush1.bf16.msra.mxu0 0
    %2094 = vmatprep.subr.bf16.mxu0 0
    %2095 = vmatpush1.bf16.msra.mxu0 0
    %2096 = vmatprep.subr.bf16.mxu0 0
    %2097 = vmatpush1.bf16.msra.mxu0 0
    %2098 = vmatprep.subr.bf16.mxu0 %v682
    %2099 = vmatpush1.bf16.msra.mxu0 %v681
    %2100 = vmatprep.subr.bf16.mxu0 %v618
    %2101 = vmatpush1.bf16.msra.mxu0 %v617
    %2102 = vmatprep.subr.bf16.mxu0 0
    %2103 = vmatpush2.bf16.msra.mxu0 0
    %2104 = vmatprep.subr.bf16.mxu0 0
    %2105 = vmatpush2.bf16.msra.mxu0 0
    %2106 = vmatprep.subr.bf16.mxu0 0
    %2107 = vmatpush2.bf16.msra.mxu0 0
    %2108 = vmatprep.subr.bf16.mxu0 0
    %2109 = vmatpush2.bf16.msra.mxu0 0
    %2110 = vmatprep.subr.bf16.mxu0 0
    %2111 = vmatpush2.bf16.msra.mxu0 0
    %2112 = vmatprep.subr.bf16.mxu0 0
    %2113 = vmatpush2.bf16.msra.mxu0 0
    %2114 = vmatprep.subr.bf16.mxu0 0
    %2115 = vmatpush2.bf16.msra.mxu0 0
    %2116 = vmatprep.subr.bf16.mxu0 0
    %2117 = vmatpush2.bf16.msra.mxu0 0
    %2118 = vmatprep.mubr.bf16.mxu0 0
    %2119 = vmatmul.mubr.bf16.gmra.mxu0 %v813
    %v2120 = vpop.f32.mrf.mxu0
    %v2121 = vadd.f32 %v169, %v2120
    %v2122 = vpop.f32.mrf.mxu0
    %v2123 = vadd.f32 %v169, %v2122
    %v2124 = vpop.f32.mrf.mxu0
    %v2125 = vpop.f32.mrf.mxu0
    %2126 = vdwg.mxu0
    %v2127 = vadd.f32 %v850, %v852
    %v2128 = vadd.f32 %v2127, %v891
    %v2129 = vadd.f32 %v2128, %v893
    %v2130 = vadd.f32 %v2129, %v932
    %v2131 = vadd.f32 %v2130, %v934
    %v2132 = vadd.f32 %v2131, %v973
    %v2133 = vadd.f32 %v2132, %v975
    %v2134 = vadd.f32 %v2133, %v1014
    %v2135 = vadd.f32 %v2134, %v1016
    %v2136 = vadd.f32 %v2135, %v1055
    %v2137 = vadd.f32 %v2136, %v1057
    %v2138 = vadd.f32 %v2137, %v1096
    %v2139 = vadd.f32 %v2138, %v1098
    %v2140 = vadd.f32 %v2139, %v1137
    %v2141 = vadd.f32 %v2140, %v1139
    %v2142 = vadd.f32 %v2141, %v1178
    %v2143 = vadd.f32 %v2142, %v1180
    %v2144 = vadd.f32 %v2143, %v1219
    %v2145 = vadd.f32 %v2144, %v1221
    %v2146 = vadd.f32 %v2145, %v1260
    %v2147 = vadd.f32 %v2146, %v1262
    %v2148 = vadd.f32 %v2147, %v1301
    %v2149 = vadd.f32 %v2148, %v1303
    %v2150 = vadd.f32 %v2149, %v1342
    %v2151 = vadd.f32 %v2150, %v1344
    %v2152 = vadd.f32 %v2151, %v1383
    %v2153 = vadd.f32 %v2152, %v1385
    %v2154 = vadd.f32 %v2153, %v1424
    %v2155 = vadd.f32 %v2154, %v1426
    %v2156 = vadd.f32 %v2155, %v1465
    %v2157 = vadd.f32 %v2156, %v1467
    %v2158 = vadd.f32 %v2157, %v1506
    %v2159 = vadd.f32 %v2158, %v1508
    %v2160 = vadd.f32 %v2159, %v1547
    %v2161 = vadd.f32 %v2160, %v1549
    %v2162 = vadd.f32 %v2161, %v1588
    %v2163 = vadd.f32 %v2162, %v1590
    %v2164 = vadd.f32 %v2163, %v1629
    %v2165 = vadd.f32 %v2164, %v1631
    %v2166 = vadd.f32 %v2165, %v1670
    %v2167 = vadd.f32 %v2166, %v1672
    %v2168 = vadd.f32 %v2167, %v1711
    %v2169 = vadd.f32 %v2168, %v1713
    %v2170 = vadd.f32 %v2169, %v1752
    %v2171 = vadd.f32 %v2170, %v1754
    %v2172 = vadd.f32 %v2171, %v1793
    %v2173 = vadd.f32 %v2172, %v1795
    %v2174 = vadd.f32 %v2173, %v1834
    %v2175 = vadd.f32 %v2174, %v1836
    %v2176 = vadd.f32 %v2175, %v1875
    %v2177 = vadd.f32 %v2176, %v1877
    %v2178 = vadd.f32 %v2177, %v1916
    %v2179 = vadd.f32 %v2178, %v1918
    %v2180 = vadd.f32 %v2179, %v1957
    %v2181 = vadd.f32 %v2180, %v1959
    %v2182 = vadd.f32 %v2181, %v1998
    %v2183 = vadd.f32 %v2182, %v2000
    %v2184 = vadd.f32 %v2183, %v2039
    %v2185 = vadd.f32 %v2184, %v2041
    %v2186 = vadd.f32 %v2185, %v2080
    %v2187 = vadd.f32 %v2186, %v2082
    %v2188 = vadd.f32 %v2187, %v2121
    %v2189 = vadd.f32 %v2188, %v2123
    %2190 = vadd.xlane.f32.xlu0 %v2189
    %v2191 = vpop.xlane.xlu0 %2190
    %v2192 = vmul.f32 %v850, %v850
    %v2193 = vmul.f32 %v852, %v852
    %v2194 = vmul.f32 %v891, %v891
    %v2195 = vmul.f32 %v893, %v893
    %v2196 = vmul.f32 %v932, %v932
    %v2197 = vmul.f32 %v934, %v934
    %v2198 = vmul.f32 %v973, %v973
    %v2199 = vmul.f32 %v975, %v975
    %v2200 = vmul.f32 %v1014, %v1014
    %v2201 = vmul.f32 %v1016, %v1016
    %v2202 = vmul.f32 %v1055, %v1055
    %v2203 = vmul.f32 %v1057, %v1057
    %v2204 = vmul.f32 %v1096, %v1096
    %v2205 = vmul.f32 %v1098, %v1098
    %v2206 = vmul.f32 %v1137, %v1137
    %v2207 = vmul.f32 %v1139, %v1139
    %v2208 = vmul.f32 %v1178, %v1178
    %v2209 = vmul.f32 %v1180, %v1180
    %v2210 = vmul.f32 %v1219, %v1219
    %v2211 = vmul.f32 %v1221, %v1221
    %v2212 = vmul.f32 %v1260, %v1260
    %v2213 = vmul.f32 %v1262, %v1262
    %v2214 = vmul.f32 %v1301, %v1301
    %v2215 = vmul.f32 %v1303, %v1303
    %v2216 = vmul.f32 %v1342, %v1342
    %v2217 = vmul.f32 %v1344, %v1344
    %v2218 = vmul.f32 %v1383, %v1383
    %v2219 = vmul.f32 %v1385, %v1385
    %v2220 = vmul.f32 %v1424, %v1424
    %v2221 = vmul.f32 %v1426, %v1426
    %v2222 = vmul.f32 %v1465, %v1465
    %v2223 = vmul.f32 %v1467, %v1467
    %v2224 = vmul.f32 %v1506, %v1506
    %v2225 = vmul.f32 %v1508, %v1508
    %v2226 = vmul.f32 %v1547, %v1547
    %v2227 = vmul.f32 %v1549, %v1549
    %v2228 = vmul.f32 %v1588, %v1588
    %v2229 = vmul.f32 %v1590, %v1590
    %v2230 = vmul.f32 %v1629, %v1629
    %v2231 = vmul.f32 %v1631, %v1631
    %v2232 = vmul.f32 %v1670, %v1670
    %v2233 = vmul.f32 %v1672, %v1672
    %v2234 = vmul.f32 %v1711, %v1711
    %v2235 = vmul.f32 %v1713, %v1713
    %v2236 = vmul.f32 %v1752, %v1752
    %v2237 = vmul.f32 %v1754, %v1754
    %v2238 = vmul.f32 %v1793, %v1793
    %v2239 = vmul.f32 %v1795, %v1795
    %v2240 = vmul.f32 %v1834, %v1834
    %v2241 = vmul.f32 %v1836, %v1836
    %v2242 = vmul.f32 %v1875, %v1875
    %v2243 = vmul.f32 %v1877, %v1877
    %v2244 = vmul.f32 %v1916, %v1916
    %v2245 = vmul.f32 %v1918, %v1918
    %v2246 = vmul.f32 %v1957, %v1957
    %v2247 = vmul.f32 %v1959, %v1959
    %v2248 = vmul.f32 %v1998, %v1998
    %v2249 = vmul.f32 %v2000, %v2000
    %v2250 = vmul.f32 %v2039, %v2039
    %v2251 = vmul.f32 %v2041, %v2041
    %v2252 = vmul.f32 %v2080, %v2080
    %v2253 = vmul.f32 %v2082, %v2082
    %v2254 = vmul.f32 %v2121, %v2121
    %v2255 = vmul.f32 %v2123, %v2123
    %v2256 = vadd.f32 %v2192, %v2193
    %v2257 = vadd.f32 %v2256, %v2194
    %v2258 = vadd.f32 %v2257, %v2195
    %v2259 = vadd.f32 %v2258, %v2196
    %v2260 = vadd.f32 %v2259, %v2197
    %v2261 = vadd.f32 %v2260, %v2198
    %v2262 = vadd.f32 %v2261, %v2199
    %v2263 = vadd.f32 %v2262, %v2200
    %v2264 = vadd.f32 %v2263, %v2201
    %v2265 = vadd.f32 %v2264, %v2202
    %v2266 = vadd.f32 %v2265, %v2203
    %v2267 = vadd.f32 %v2266, %v2204
    %v2268 = vadd.f32 %v2267, %v2205
    %v2269 = vadd.f32 %v2268, %v2206
    %v2270 = vadd.f32 %v2269, %v2207
    %v2271 = vadd.f32 %v2270, %v2208
    %v2272 = vadd.f32 %v2271, %v2209
    %v2273 = vadd.f32 %v2272, %v2210
    %v2274 = vadd.f32 %v2273, %v2211
    %v2275 = vadd.f32 %v2274, %v2212
    %v2276 = vadd.f32 %v2275, %v2213
    %v2277 = vadd.f32 %v2276, %v2214
    %v2278 = vadd.f32 %v2277, %v2215
    %v2279 = vadd.f32 %v2278, %v2216
    %v2280 = vadd.f32 %v2279, %v2217
    %v2281 = vadd.f32 %v2280, %v2218
    %v2282 = vadd.f32 %v2281, %v2219
    %v2283 = vadd.f32 %v2282, %v2220
    %v2284 = vadd.f32 %v2283, %v2221
    %v2285 = vadd.f32 %v2284, %v2222
    %v2286 = vadd.f32 %v2285, %v2223
    %v2287 = vadd.f32 %v2286, %v2224
    %v2288 = vadd.f32 %v2287, %v2225
    %v2289 = vadd.f32 %v2288, %v2226
    %v2290 = vadd.f32 %v2289, %v2227
    %v2291 = vadd.f32 %v2290, %v2228
    %v2292 = vadd.f32 %v2291, %v2229
    %v2293 = vadd.f32 %v2292, %v2230
    %v2294 = vadd.f32 %v2293, %v2231
    %v2295 = vadd.f32 %v2294, %v2232
    %v2296 = vadd.f32 %v2295, %v2233
    %v2297 = vadd.f32 %v2296, %v2234
    %v2298 = vadd.f32 %v2297, %v2235
    %v2299 = vadd.f32 %v2298, %v2236
    %v2300 = vadd.f32 %v2299, %v2237
    %v2301 = vadd.f32 %v2300, %v2238
    %v2302 = vadd.f32 %v2301, %v2239
    %v2303 = vadd.f32 %v2302, %v2240
    %v2304 = vadd.f32 %v2303, %v2241
    %v2305 = vadd.f32 %v2304, %v2242
    %v2306 = vadd.f32 %v2305, %v2243
    %v2307 = vadd.f32 %v2306, %v2244
    %v2308 = vadd.f32 %v2307, %v2245
    %v2309 = vadd.f32 %v2308, %v2246
    %v2310 = vadd.f32 %v2309, %v2247
    %v2311 = vadd.f32 %v2310, %v2248
    %v2312 = vadd.f32 %v2311, %v2249
    %v2313 = vadd.f32 %v2312, %v2250
    %v2314 = vadd.f32 %v2313, %v2251
    %v2315 = vadd.f32 %v2314, %v2252
    %v2316 = vadd.f32 %v2315, %v2253
    %v2317 = vadd.f32 %v2316, %v2254
    %v2318 = vadd.f32 %v2317, %v2255
    %2319 = vadd.xlane.f32.xlu0 %v2318
    %v2320 = vpop.xlane.xlu0 %2319
    %v2321 = vmul.f32 %v2191, 0.00012207031
    %v2322 = vmul.f32 %v2320, 0.00012207031
    %v2323 = vmul.f32 %v2321, %v2321
    %v2324 = vsub.f32 %v2322, %v2323
    %v2325 = vld [vmem:[%s3] sm:$0xff]
    %v2326 = vadd.f32 %v2324, 1e-05
    %v2327 = vrsqrt.pop %v2326
    %v2328 = vmul.f32 %v2325, %v2327
    %v2329 = vld [vmem:[%s4] sm:$0xff]
    %v2330 = vmul.f32 %v2321, %v2328
    %v2331 = vsub.f32 %v2329, %v2330
    %2333 = vset.pattern.permute.xlu0 0
    %2334 = vperm.xlu0 %2333, %v2328
    %v2335 = vpop.permute.xlu0 %2334
    %v2337 = vmul.f32 %v850, %v2335
    %v2338 = vmul.f32 %v852, %v2335
    %v2339 = vmul.f32 %v891, %v2335
    %v2340 = vmul.f32 %v893, %v2335
    %v2341 = vmul.f32 %v932, %v2335
    %v2342 = vmul.f32 %v934, %v2335
    %v2343 = vmul.f32 %v973, %v2335
    %v2344 = vmul.f32 %v975, %v2335
    %v2345 = vmul.f32 %v1014, %v2335
    %v2346 = vmul.f32 %v1016, %v2335
    %v2347 = vmul.f32 %v1055, %v2335
    %v2348 = vmul.f32 %v1057, %v2335
    %v2349 = vmul.f32 %v1096, %v2335
    %v2350 = vmul.f32 %v1098, %v2335
    %v2351 = vmul.f32 %v1137, %v2335
    %v2352 = vmul.f32 %v1139, %v2335
    %v2353 = vmul.f32 %v1178, %v2335
    %v2354 = vmul.f32 %v1180, %v2335
    %v2355 = vmul.f32 %v1219, %v2335
    %v2356 = vmul.f32 %v1221, %v2335
    %v2357 = vmul.f32 %v1260, %v2335
    %v2358 = vmul.f32 %v1262, %v2335
    %v2359 = vmul.f32 %v1301, %v2335
    %v2360 = vmul.f32 %v1303, %v2335
    %v2361 = vmul.f32 %v1342, %v2335
    %v2362 = vmul.f32 %v1344, %v2335
    %v2363 = vmul.f32 %v1383, %v2335
    %v2364 = vmul.f32 %v1385, %v2335
    %v2365 = vmul.f32 %v1424, %v2335
    %v2366 = vmul.f32 %v1426, %v2335
    %v2367 = vmul.f32 %v1465, %v2335
    %v2368 = vmul.f32 %v1467, %v2335
    %v2369 = vmul.f32 %v1506, %v2335
    %v2370 = vmul.f32 %v1508, %v2335
    %v2371 = vmul.f32 %v1547, %v2335
    %v2372 = vmul.f32 %v1549, %v2335
    %v2373 = vmul.f32 %v1588, %v2335
    %v2374 = vmul.f32 %v1590, %v2335
    %v2375 = vmul.f32 %v1629, %v2335
    %v2376 = vmul.f32 %v1631, %v2335
    %v2377 = vmul.f32 %v1670, %v2335
    %v2378 = vmul.f32 %v1672, %v2335
    %v2379 = vmul.f32 %v1711, %v2335
    %v2380 = vmul.f32 %v1713, %v2335
    %v2381 = vmul.f32 %v1752, %v2335
    %v2382 = vmul.f32 %v1754, %v2335
    %v2383 = vmul.f32 %v1793, %v2335
    %v2384 = vmul.f32 %v1795, %v2335
    %v2385 = vmul.f32 %v1834, %v2335
    %v2386 = vmul.f32 %v1836, %v2335
    %v2387 = vmul.f32 %v1875, %v2335
    %v2388 = vmul.f32 %v1877, %v2335
    %v2389 = vmul.f32 %v1916, %v2335
    %v2390 = vmul.f32 %v1918, %v2335
    %v2391 = vmul.f32 %v1957, %v2335
    %v2392 = vmul.f32 %v1959, %v2335
    %v2393 = vmul.f32 %v1998, %v2335
    %v2394 = vmul.f32 %v2000, %v2335
    %v2395 = vmul.f32 %v2039, %v2335
    %v2396 = vmul.f32 %v2041, %v2335
    %v2397 = vmul.f32 %v2080, %v2335
    %v2398 = vmul.f32 %v2082, %v2335
    %v2399 = vmul.f32 %v2121, %v2335
    %v2400 = vmul.f32 %v2123, %v2335
    %2402 = vset.pattern.permute.xlu0 0
    %2403 = vperm.xlu0 %2402, %v2331
    %v2404 = vpop.permute.xlu0 %2403
    %v2406 = vadd.f32 %v2337, %v2404
    %v2407 = vadd.f32 %v2338, %v2404
    %v2408 = vadd.f32 %v2339, %v2404
    %v2409 = vadd.f32 %v2340, %v2404
    %v2410 = vadd.f32 %v2341, %v2404
    %v2411 = vadd.f32 %v2342, %v2404
    %v2412 = vadd.f32 %v2343, %v2404
    %v2413 = vadd.f32 %v2344, %v2404
    %v2414 = vadd.f32 %v2345, %v2404
    %v2415 = vadd.f32 %v2346, %v2404
    %v2416 = vadd.f32 %v2347, %v2404
    %v2417 = vadd.f32 %v2348, %v2404
    %v2418 = vadd.f32 %v2349, %v2404
    %v2419 = vadd.f32 %v2350, %v2404
    %v2420 = vadd.f32 %v2351, %v2404
    %v2421 = vadd.f32 %v2352, %v2404
    %v2422 = vadd.f32 %v2353, %v2404
    %v2423 = vadd.f32 %v2354, %v2404
    %v2424 = vadd.f32 %v2355, %v2404
    %v2425 = vadd.f32 %v2356, %v2404
    %v2426 = vadd.f32 %v2357, %v2404
    %v2427 = vadd.f32 %v2358, %v2404
    %v2428 = vadd.f32 %v2359, %v2404
    %v2429 = vadd.f32 %v2360, %v2404
    %v2430 = vadd.f32 %v2361, %v2404
    %v2431 = vadd.f32 %v2362, %v2404
    %v2432 = vadd.f32 %v2363, %v2404
    %v2433 = vadd.f32 %v2364, %v2404
    %v2434 = vadd.f32 %v2365, %v2404
    %v2435 = vadd.f32 %v2366, %v2404
    %v2436 = vadd.f32 %v2367, %v2404
    %v2437 = vadd.f32 %v2368, %v2404
    %v2438 = vadd.f32 %v2369, %v2404
    %v2439 = vadd.f32 %v2370, %v2404
    %v2440 = vadd.f32 %v2371, %v2404
    %v2441 = vadd.f32 %v2372, %v2404
    %v2442 = vadd.f32 %v2373, %v2404
    %v2443 = vadd.f32 %v2374, %v2404
    %v2444 = vadd.f32 %v2375, %v2404
    %v2445 = vadd.f32 %v2376, %v2404
    %v2446 = vadd.f32 %v2377, %v2404
    %v2447 = vadd.f32 %v2378, %v2404
    %v2448 = vadd.f32 %v2379, %v2404
    %v2449 = vadd.f32 %v2380, %v2404
    %v2450 = vadd.f32 %v2381, %v2404
    %v2451 = vadd.f32 %v2382, %v2404
    %v2452 = vadd.f32 %v2383, %v2404
    %v2453 = vadd.f32 %v2384, %v2404
    %v2454 = vadd.f32 %v2385, %v2404
    %v2455 = vadd.f32 %v2386, %v2404
    %v2456 = vadd.f32 %v2387, %v2404
    %v2457 = vadd.f32 %v2388, %v2404
    %v2458 = vadd.f32 %v2389, %v2404
    %v2459 = vadd.f32 %v2390, %v2404
    %v2460 = vadd.f32 %v2391, %v2404
    %v2461 = vadd.f32 %v2392, %v2404
    %v2462 = vadd.f32 %v2393, %v2404
    %v2463 = vadd.f32 %v2394, %v2404
    %v2464 = vadd.f32 %v2395, %v2404
    %v2465 = vadd.f32 %v2396, %v2404
    %v2466 = vadd.f32 %v2397, %v2404
    %v2467 = vadd.f32 %v2398, %v2404
    %v2468 = vadd.f32 %v2399, %v2404
    %v2469 = vadd.f32 %v2400, %v2404
    %v2470 = vmax.f32 %v2406, 0.0
    %v2471 = vmax.f32 %v2407, 0.0
    %v2472 = vmax.f32 %v2408, 0.0
    %v2473 = vmax.f32 %v2409, 0.0
    %v2474 = vmax.f32 %v2410, 0.0
    %v2475 = vmax.f32 %v2411, 0.0
    %v2476 = vmax.f32 %v2412, 0.0
    %v2477 = vmax.f32 %v2413, 0.0
    %v2478 = vmax.f32 %v2414, 0.0
    %v2479 = vmax.f32 %v2415, 0.0
    %v2480 = vmax.f32 %v2416, 0.0
    %v2481 = vmax.f32 %v2417, 0.0
    %v2482 = vmax.f32 %v2418, 0.0
    %v2483 = vmax.f32 %v2419, 0.0
    %v2484 = vmax.f32 %v2420, 0.0
    %v2485 = vmax.f32 %v2421, 0.0
    %v2486 = vmax.f32 %v2422, 0.0
    %v2487 = vmax.f32 %v2423, 0.0
    %v2488 = vmax.f32 %v2424, 0.0
    %v2489 = vmax.f32 %v2425, 0.0
    %v2490 = vmax.f32 %v2426, 0.0
    %v2491 = vmax.f32 %v2427, 0.0
    %v2492 = vmax.f32 %v2428, 0.0
    %v2493 = vmax.f32 %v2429, 0.0
    %v2494 = vmax.f32 %v2430, 0.0
    %v2495 = vmax.f32 %v2431, 0.0
    %v2496 = vmax.f32 %v2432, 0.0
    %v2497 = vmax.f32 %v2433, 0.0
    %v2498 = vmax.f32 %v2434, 0.0
    %v2499 = vmax.f32 %v2435, 0.0
    %v2500 = vmax.f32 %v2436, 0.0
    %v2501 = vmax.f32 %v2437, 0.0
    %v2502 = vmax.f32 %v2438, 0.0
    %v2503 = vmax.f32 %v2439, 0.0
    %v2504 = vmax.f32 %v2440, 0.0
    %v2505 = vmax.f32 %v2441, 0.0
    %v2506 = vmax.f32 %v2442, 0.0
    %v2507 = vmax.f32 %v2443, 0.0
    %v2508 = vmax.f32 %v2444, 0.0
    %v2509 = vmax.f32 %v2445, 0.0
    %v2510 = vmax.f32 %v2446, 0.0
    %v2511 = vmax.f32 %v2447, 0.0
    %v2512 = vmax.f32 %v2448, 0.0
    %v2513 = vmax.f32 %v2449, 0.0
    %v2514 = vmax.f32 %v2450, 0.0
    %v2515 = vmax.f32 %v2451, 0.0
    %v2516 = vmax.f32 %v2452, 0.0
    %v2517 = vmax.f32 %v2453, 0.0
    %v2518 = vmax.f32 %v2454, 0.0
    %v2519 = vmax.f32 %v2455, 0.0
    %v2520 = vmax.f32 %v2456, 0.0
    %v2521 = vmax.f32 %v2457, 0.0
    %v2522 = vmax.f32 %v2458, 0.0
    %v2523 = vmax.f32 %v2459, 0.0
    %v2524 = vmax.f32 %v2460, 0.0
    %v2525 = vmax.f32 %v2461, 0.0
    %v2526 = vmax.f32 %v2462, 0.0
    %v2527 = vmax.f32 %v2463, 0.0
    %v2528 = vmax.f32 %v2464, 0.0
    %v2529 = vmax.f32 %v2465, 0.0
    %v2530 = vmax.f32 %v2466, 0.0
    %v2531 = vmax.f32 %v2467, 0.0
    %v2532 = vmax.f32 %v2468, 0.0
    %v2533 = vmax.f32 %v2469, 0.0
    %2534 = vst [vmem:[#allocation5] sm:$0xff] %v2470
    %2535 = vst [vmem:[#allocation5 + $0x8] sm:$0xff] %v2471
    %2536 = vst [vmem:[#allocation5 + $0x10] sm:$0xff] %v2472
    %2537 = vst [vmem:[#allocation5 + $0x18] sm:$0xff] %v2473
    %2538 = vst [vmem:[#allocation5 + $0x20] sm:$0xff] %v2474
    %2539 = vst [vmem:[#allocation5 + $0x28] sm:$0xff] %v2475
    %2540 = vst [vmem:[#allocation5 + $0x30] sm:$0xff] %v2476
    %2541 = vst [vmem:[#allocation5 + $0x38] sm:$0xff] %v2477
    %2542 = vst [vmem:[#allocation5 + $0x40] sm:$0xff] %v2478
    %2543 = vst [vmem:[#allocation5 + $0x48] sm:$0xff] %v2479
    %2544 = vst [vmem:[#allocation5 + $0x50] sm:$0xff] %v2480
    %2545 = vst [vmem:[#allocation5 + $0x58] sm:$0xff] %v2481
    %2546 = vst [vmem:[#allocation5 + $0x60] sm:$0xff] %v2482
    %2547 = vst [vmem:[#allocation5 + $0x68] sm:$0xff] %v2483
    %2548 = vst [vmem:[#allocation5 + $0x70] sm:$0xff] %v2484
    %2549 = vst [vmem:[#allocation5 + $0x78] sm:$0xff] %v2485
    %2550 = vst [vmem:[#allocation5 + $0x80] sm:$0xff] %v2486
    %2551 = vst [vmem:[#allocation5 + $0x88] sm:$0xff] %v2487
    %2552 = vst [vmem:[#allocation5 + $0x90] sm:$0xff] %v2488
    %2553 = vst [vmem:[#allocation5 + $0x98] sm:$0xff] %v2489
    %2554 = vst [vmem:[#allocation5 + $0xa0] sm:$0xff] %v2490
    %2555 = vst [vmem:[#allocation5 + $0xa8] sm:$0xff] %v2491
    %2556 = vst [vmem:[#allocation5 + $0xb0] sm:$0xff] %v2492
    %2557 = vst [vmem:[#allocation5 + $0xb8] sm:$0xff] %v2493
    %2558 = vst [vmem:[#allocation5 + $0xc0] sm:$0xff] %v2494
    %2559 = vst [vmem:[#allocation5 + $0xc8] sm:$0xff] %v2495
    %2560 = vst [vmem:[#allocation5 + $0xd0] sm:$0xff] %v2496
    %2561 = vst [vmem:[#allocation5 + $0xd8] sm:$0xff] %v2497
    %2562 = vst [vmem:[#allocation5 + $0xe0] sm:$0xff] %v2498
    %2563 = vst [vmem:[#allocation5 + $0xe8] sm:$0xff] %v2499
    %2564 = vst [vmem:[#allocation5 + $0xf0] sm:$0xff] %v2500
    %2565 = vst [vmem:[#allocation5 + $0xf8] sm:$0xff] %v2501
    %2566 = vst [vmem:[#allocation5 + $0x100] sm:$0xff] %v2502
    %2567 = vst [vmem:[#allocation5 + $0x108] sm:$0xff] %v2503
    %2568 = vst [vmem:[#allocation5 + $0x110] sm:$0xff] %v2504
    %2569 = vst [vmem:[#allocation5 + $0x118] sm:$0xff] %v2505
    %2570 = vst [vmem:[#allocation5 + $0x120] sm:$0xff] %v2506
    %2571 = vst [vmem:[#allocation5 + $0x128] sm:$0xff] %v2507
    %2572 = vst [vmem:[#allocation5 + $0x130] sm:$0xff] %v2508
    %2573 = vst [vmem:[#allocation5 + $0x138] sm:$0xff] %v2509
    %2574 = vst [vmem:[#allocation5 + $0x140] sm:$0xff] %v2510
    %2575 = vst [vmem:[#allocation5 + $0x148] sm:$0xff] %v2511
    %2576 = vst [vmem:[#allocation5 + $0x150] sm:$0xff] %v2512
    %2577 = vst [vmem:[#allocation5 + $0x158] sm:$0xff] %v2513
    %2578 = vst [vmem:[#allocation5 + $0x160] sm:$0xff] %v2514
    %2579 = vst [vmem:[#allocation5 + $0x168] sm:$0xff] %v2515
    %2580 = vst [vmem:[#allocation5 + $0x170] sm:$0xff] %v2516
    %2581 = vst [vmem:[#allocation5 + $0x178] sm:$0xff] %v2517
    %2582 = vst [vmem:[#allocation5 + $0x180] sm:$0xff] %v2518
    %2583 = vst [vmem:[#allocation5 + $0x188] sm:$0xff] %v2519
    %2584 = vst [vmem:[#allocation5 + $0x190] sm:$0xff] %v2520
    %2585 = vst [vmem:[#allocation5 + $0x198] sm:$0xff] %v2521
    %2586 = vst [vmem:[#allocation5 + $0x1a0] sm:$0xff] %v2522
    %2587 = vst [vmem:[#allocation5 + $0x1a8] sm:$0xff] %v2523
    %2588 = vst [vmem:[#allocation5 + $0x1b0] sm:$0xff] %v2524
    %2589 = vst [vmem:[#allocation5 + $0x1b8] sm:$0xff] %v2525
    %2590 = vst [vmem:[#allocation5 + $0x1c0] sm:$0xff] %v2526
    %2591 = vst [vmem:[#allocation5 + $0x1c8] sm:$0xff] %v2527
    %2592 = vst [vmem:[#allocation5 + $0x1d0] sm:$0xff] %v2528
    %2593 = vst [vmem:[#allocation5 + $0x1d8] sm:$0xff] %v2529
    %2594 = vst [vmem:[#allocation5 + $0x1e0] sm:$0xff] %v2530
    %2595 = vst [vmem:[#allocation5 + $0x1e8] sm:$0xff] %v2531
    %2596 = vst [vmem:[#allocation5 + $0x1f0] sm:$0xff] %v2532
    %2597 = vst [vmem:[#allocation5 + $0x1f8] sm:$0xff] %v2533
    // Predicated region
    $region26: #{tpu_custom_call.1} parent=1 // pred_check
      _
    $region27: #{tpu_custom_call.1} parent=1 // pred_check_branch
      %2599 = sbr.rel (0) target = $region29
    $region28: #{tpu_custom_call.1} parent=1 // pred_region
      %s2601 = ssub.s32 8192, 8192
      %2602 = vsyncadd [#allocation4], %s2601
      %s2604 = sshll.u32 [#allocation5], 4
      %s2605 = int_to_ptr.vmem [resolvable:$true] %s2604
      %2607 = dma.vmem_to_hbm [thread:$0]  %s2605, 8192, %s5, [#allocation4]
    $region29: #{tpu_custom_call.1} parent=1 // pred_fallthru
      _
    // Predicated region
    $region30: #{tpu_custom_call.1} parent=1 // pred_check
      _
    $region31: #{tpu_custom_call.1} parent=1 // pred_check_branch
      %2609 = sbr.rel (0) target = $region33
    $region32: #{tpu_custom_call.1} parent=1 // pred_region
      %2610 = dma.done [#allocation4], 8192
    $region33: #{tpu_custom_call.1} parent=1 // pred_fallthru
      _
    %2611 = vsyncpa [#allocation3], 1
    %2612 = vsyncpa [#allocation4], 1

</llo_original>
